<compile_context>
chip_gen: v7x
topology: tpu7x:2x2x1
jax: 0.10.0
libtpu: 0.0.40
codegen_flags: <defaults>
</compile_context>

<pallas_src>
import functools

import jax
import jax.numpy as jnp
from jax import lax
from jax.experimental import pallas as pl
from jax.experimental.pallas import tpu as pltpu


_VMEM_LIMIT = 48 * 1024 * 1024   # explicit scoped-VMEM budget (< v7x's 64 MiB physical)


def _round_up(x, m):
    return (x + m - 1) // m * m


def _cdiv(a, b):
    return (a + b - 1) // b


# ----------------------------------------------------------------------------
# Tiling helpers
# ----------------------------------------------------------------------------
def _k_tiles(k):
    """Contraction-dim padding / tile."""
    if k <= 1024:                          # single deep-K tile, no reduction grid axis
        kp = _round_up(k, 8)
        return kp, kp
    kp = _round_up(k, 128)
    for t in (512, 384, 256, 128):
        if kp % t == 0:
            return kp, t
    return kp, 128


def _n_tiles(n):
    """Lane-dense output padding / tile (multiple of 128, 256 when wide)."""
    np_ = _round_up(n, 128)
    if np_ <= 512:
        return np_, np_
    if np_ % 256:
        np_ = _round_up(n, 256)
    return np_, (512 if np_ % 512 == 0 else 256)


def _m_tile(m, target=512):
    nmt = max(1, _cdiv(m, target))
    return max(8, _round_up(_cdiv(m, nmt), 8))


# ----------------------------------------------------------------------------
# Pallas kernels
# ----------------------------------------------------------------------------
def _finalize(acc_ref, b_ref, o_ref, relu):
    r = acc_ref[...] + b_ref[...]
    if relu:
        r = jnp.maximum(r, 0.0)
    o_ref[...] = r.astype(o_ref.dtype)


def _mm_kernel(x_ref, w_ref, b_ref, o_ref, *acc, relu, k_steps):
    """Tiled matmul (bf16 operands, f32 accumulation) with fused bias + optional ReLU."""
    d = jnp.dot(x_ref[...], w_ref[...], preferred_element_type=jnp.float32)
    if k_steps == 1:                       # common case: no VMEM accumulator round-trip
        r = d + b_ref[...]
        if relu:
            r = jnp.maximum(r, 0.0)
        o_ref[...] = r.astype(o_ref.dtype)
    else:
        acc_ref = acc[0]

        @pl.when(pl.program_id(2) == 0)
        def _():
            acc_ref[...] = jnp.zeros_like(acc_ref)

        acc_ref[...] += d

        @pl.when(pl.program_id(2) == pl.num_programs(2) - 1)
        def _():
            _finalize(acc_ref, b_ref, o_ref, relu)


def _conv_tap_kernel(xa_ref, xb_ref, w_ref, b_ref, o_ref, *acc, shifts, relu, k_steps):
    """im2col-free stride-1 convolution.

    The zero-padded activation is a flat (rows, Cin) matrix.  For kernel tap (ki, kj)
    output row q needs input row q + ki*Wp + kj (a constant shift).  xa is the current
    TM-row block; xb is a small halo of round_up(maxshift, 8) extra rows, so each
    shifted TM-row window is a static slice of ONE concatenated (TM+halo, TK) buffer.
    All taps accumulate into a local f32 value; w_ref holds all taps (kh*kw, TK, TN).
    """
    tm = xa_ref.shape[0]
    ext = jnp.concatenate([xa_ref[...], xb_ref[...]], axis=0)   # (tm + halo, tk)

    d = jnp.dot(xa_ref[...], w_ref[0], preferred_element_type=jnp.float32)  # shift 0
    for t in range(1, len(shifts)):
        s = shifts[t]
        d = d + jnp.dot(ext[s:s + tm], w_ref[t], preferred_element_type=jnp.float32)

    if k_steps == 1:                       # Cin <= 1024 for every Inception conv
        r = d + b_ref[...]
        if relu:
            r = jnp.maximum(r, 0.0)
        o_ref[...] = r.astype(o_ref.dtype)
    else:
        acc_ref = acc[0]

        @pl.when(pl.program_id(2) == 0)
        def _():
            acc_ref[...] = jnp.zeros_like(acc_ref)

        acc_ref[...] += d

        @pl.when(pl.program_id(2) == pl.num_programs(2) - 1)
        def _():
            _finalize(acc_ref, b_ref, o_ref, relu)


# ----------------------------------------------------------------------------
# pallas_call wrappers
# ----------------------------------------------------------------------------
def _pallas_matmul(x, w, b, *, relu, out_dtype=jnp.bfloat16):
    """x:(M,K), w:(K,N), b:(N,) -> (M,N).  bf16 MXU matmul, fused bias/ReLU."""
    m, k = x.shape
    n = w.shape[1]
    kp, tk = _k_tiles(k)
    np_, tn = _n_tiles(n)
    tm = _m_tile(m)

    xq = x.astype(jnp.bfloat16)
    if kp != k:
        xq = jnp.pad(xq, ((0, 0), (0, kp - k)))
    wq = w.astype(jnp.bfloat16)
    if (kp, np_) != (k, n):
        wq = jnp.pad(wq, ((0, kp - k), (0, np_ - n)))
    bq = b.astype(jnp.float32).reshape(1, n)
    if np_ != n:
        bq = jnp.pad(bq, ((0, 0), (0, np_ - n)))

    k_steps = kp // tk
    grid = (_cdiv(m, tm), np_ // tn, k_steps)
    scratch = [] if k_steps == 1 else [pltpu.VMEM((tm, tn), jnp.float32)]

    out = pl.pallas_call(
        functools.partial(_mm_kernel, relu=relu, k_steps=k_steps),
        out_shape=jax.ShapeDtypeStruct((m, np_), out_dtype),
        grid_spec=pltpu.PrefetchScalarGridSpec(
            num_scalar_prefetch=0,
            grid=grid,
            in_specs=[
                pl.BlockSpec((tm, tk), lambda i, j, kk: (i, kk)),
                pl.BlockSpec((tk, tn), lambda i, j, kk: (kk, j)),
                pl.BlockSpec((1, tn), lambda i, j, kk: (0, j)),
            ],
            out_specs=pl.BlockSpec((tm, tn), lambda i, j, kk: (i, j)),
            scratch_shapes=scratch,
        ),
        compiler_params=pltpu.CompilerParams(
            dimension_semantics=("parallel", "parallel", "arbitrary"),
            vmem_limit_bytes=_VMEM_LIMIT),
    )(xq, wq, bq)
    return out if np_ == n else out[:, :n]


def _conv_s1_pallas(x, p, relu):
    """Stride-1 conv + folded BN + ReLU via the shifted-window Pallas kernel."""
    kh, kw, ph, pw = p["kh"], p["kw"], p["ph"], p["pw"]
    cin, cout = p["cin"], p["cout"]
    n, h, w = x.shape[0], x.shape[1], x.shape[2]
    hp, wp = h + 2 * ph, w + 2 * pw
    ho, wo = hp - kh + 1, wp - kw + 1
    m = n * hp * wp
    taps = kh * kw
    shifts = tuple(ki * wp + kj for ki in range(kh) for kj in range(kw))
    maxshift = shifts[-1]

    kp, tk = _k_tiles(cin)
    np_, tn = _n_tiles(cout)

    halo = _round_up(max(maxshift, 8), 8)
    tm = halo * max(1, 512 // halo)                 # ~512-row tile, multiple of halo
    tm = min(tm, _round_up(m, halo))
    mp = _round_up(m, tm)
    ratio = tm // halo

    # Single padded copy: spatial zero pad, channel pad to kp, plus whole zero images so
    # that the flat matrix has at least mp + halo rows (the halo window of the last tile).
    # TODO(synk): activations are still zero-padded / sliced around each stride-1 conv in
    #             XLA instead of staying in the padded (hp, wp) layout between layers.
    dn = _cdiv(max(mp + halo - m, 0), hp * wp)
    xq = jnp.pad(x.astype(jnp.bfloat16),
                 ((0, dn), (ph, ph), (pw, pw), (0, kp - cin)))
    xf = xq.reshape((n + dn) * hp * wp, kp)

    wq = p["w"]                                      # (taps, cin, cout) bf16, BN folded
    if (kp, np_) != (cin, cout):
        wq = jnp.pad(wq, ((0, 0), (0, kp - cin), (0, np_ - cout)))
    bq = p["b"].reshape(1, cout)
    if np_ != cout:
        bq = jnp.pad(bq, ((0, 0), (0, np_ - cout)))

    k_steps = kp // tk
    grid = (mp // tm, np_ // tn, k_steps)
    scratch = [] if k_steps == 1 else [pltpu.VMEM((tm, tn), jnp.float32)]

    out = pl.pallas_call(
        functools.partial(_conv_tap_kernel, shifts=shifts, relu=relu, k_steps=k_steps),
        out_shape=jax.ShapeDtypeStruct((mp, np_), jnp.bfloat16),
        grid_spec=pltpu.PrefetchScalarGridSpec(
            num_scalar_prefetch=0,
            grid=grid,
            in_specs=[
                pl.BlockSpec((tm, tk), lambda i, j, kk: (i, kk)),              # current
                pl.BlockSpec((halo, tk), lambda i, j, kk: ((i + 1) * ratio, kk)),  # halo
                pl.BlockSpec((taps, tk, tn), lambda i, j, kk: (0, kk, j)),
                pl.BlockSpec((1, tn), lambda i, j, kk: (0, j)),
            ],
            out_specs=pl.BlockSpec((tm, tn), lambda i, j, kk: (i, j)),
            scratch_shapes=scratch,
        ),
        compiler_params=pltpu.CompilerParams(
            dimension_semantics=("parallel", "parallel", "arbitrary"),
            vmem_limit_bytes=_VMEM_LIMIT),
    )(xf, xf, wq, bq)

    y = out[:m].reshape(n, hp, wp, np_)[:, :ho, :wo, :cout]
    return y


def _im2col(x, kh, kw, stride, ph, pw):
    """Patch extraction for the few strided convs (tap-major, channel-minor)."""
    n, h, w, c = x.shape
    xp = jnp.pad(x, ((0, 0), (ph, ph), (pw, pw), (0, 0)))
    ho = (h + 2 * ph - kh) // stride + 1
    wo = (w + 2 * pw - kw) // stride + 1
    cols = []
    for i in range(kh):
        for j in range(kw):
            cols.append(xp[:, i:i + stride * ho:stride, j:j + stride * wo:stride, :])
    patches = jnp.stack(cols, axis=3).reshape(n * ho * wo, kh * kw * c)
    return patches, n, ho, wo


def conv_bn(x, p, stride=1, relu=True):
    """BasicConv2d: Conv2d(bias=False) + BatchNorm2d(eval, folded) + ReLU."""
    kh, kw = p["kh"], p["kw"]
    cin, cout = p["cin"], p["cout"]
    if kh == 1 and kw == 1 and stride == 1:
        n, h, w = x.shape[0], x.shape[1], x.shape[2]
        y = _pallas_matmul(x.reshape(n * h * w, cin), p["w"][0], p["b"], relu=relu)
        return y.reshape(n, h, w, cout)
    if stride == 1:
        return _conv_s1_pallas(x, p, relu)
    # TODO(synk): the 5 stride-2 convs (stem + Mixed_6a/7a reduction branches) still use
    #             an XLA im2col in front of the Pallas matmul; all stride-1 convs use the
    #             direct shifted-window path.
    patches, n, ho, wo = _im2col(x, kh, kw, stride, p["ph"], p["pw"])
    y = _pallas_matmul(patches, p["w"].reshape(kh * kw * cin, cout), p["b"], relu=relu)
    return y.reshape(n, ho, wo, cout)


def _fused_1x1(x, fp):
    """All 1x1 branch heads of an Inception block in one wide, lane-dense matmul."""
    n, h, w, c = x.shape
    y = _pallas_matmul(x.reshape(n * h * w, c), fp["w"], fp["b"], relu=True)
    y = y.reshape(n, h, w, -1)
    outs, off = [], 0
    for sz in fp["sizes"]:
        outs.append(y[..., off:off + sz])
        off += sz
    return outs


# ----------------------------------------------------------------------------
# Pooling / input transform (XLA ops)
# ----------------------------------------------------------------------------
# TODO(synk): pooling uses lax.reduce_window (XLA) rather than a fused Pallas kernel.
def _max_pool_3x3_s2(x):
    return lax.reduce_window(x, jnp.array(-jnp.inf, x.dtype), lax.max,
                             (1, 3, 3, 1), (1, 2, 2, 1), "VALID")


def _avg_pool_3x3_s1(x):
    # f32 accumulation fused by XLA into the reduce_window; result stays bf16.
    s = lax.reduce_window(x.astype(jnp.float32), 0.0, lax.add,
                          (1, 3, 3, 1), (1, 1, 1, 1),
                          [(0, 0), (1, 1), (1, 1), (0, 0)])
    return (s * (1.0 / 9.0)).astype(x.dtype)  # count_include_pad=True, like F.avg_pool2d


def _transform_input(x):
    # torchvision sets transform_input=True when pretrained weights are used.
    ch0 = x[:, 0:1] * (0.229 / 0.5) + (0.485 - 0.5) / 0.5
    ch1 = x[:, 1:2] * (0.224 / 0.5) + (0.456 - 0.5) / 0.5
    ch2 = x[:, 2:3] * (0.225 / 0.5) + (0.406 - 0.5) / 0.5
    return jnp.concatenate([ch0, ch1, ch2], axis=1)


# ----------------------------------------------------------------------------
# Inception blocks (forward)
# ----------------------------------------------------------------------------
# TODO(synk): the end-of-block concatenations are XLA copies; writing branch outputs
#             directly into channel slices of the block output is not implemented.
def inception_a(x, p):
    b1, b5, b3 = _fused_1x1(x, p["_fused1x1"])      # branch1x1 / branch5x5_1 / branch3x3dbl_1
    b5 = conv_bn(b5, p["branch5x5_2"])
    b3 = conv_bn(conv_bn(b3, p["branch3x3dbl_2"]), p["branch3x3dbl_3"])
    bp = conv_bn(_avg_pool_3x3_s1(x), p["branch_pool"])
    return jnp.concatenate([b1, b5, b3, bp], axis=-1)


def inception_b(x, p):
    b3 = conv_bn(x, p["branch3x3"], stride=2)
    bd = conv_bn(conv_bn(x, p["branch3x3dbl_1"]), p["branch3x3dbl_2"])
    bd = conv_bn(bd, p["branch3x3dbl_3"], stride=2)
    bp = _max_pool_3x3_s2(x)
    return jnp.concatenate([b3, bd, bp], axis=-1)


def inception_c(x, p):
    b1, b7, bd = _fused_1x1(x, p["_fused1x1"])      # branch1x1 / branch7x7_1 / branch7x7dbl_1
    b7 = conv_bn(conv_bn(b7, p["branch7x7_2"]), p["branch7x7_3"])
    for name in ("branch7x7dbl_2", "branch7x7dbl_3", "branch7x7dbl_4", "branch7x7dbl_5"):
        bd = conv_bn(bd, p[name])
    bp = conv_bn(_avg_pool_3x3_s1(x), p["branch_pool"])
    return jnp.concatenate([b1, b7, bd, bp], axis=-1)


def inception_d(x, p):
    b3, b7 = _fused_1x1(x, p["_fused1x1"])          # branch3x3_1 / branch7x7x3_1
    b3 = conv_bn(b3, p["branch3x3_2"], stride=2)
    b7 = conv_bn(conv_bn(b7, p["branch7x7x3_2"]), p["branch7x7x3_3"])
    b7 = conv_bn(b7, p["branch7x7x3_4"], stride=2)
    bp = _max_pool_3x3_s2(x)
    return jnp.concatenate([b3, b7, bp], axis=-1)


def inception_e(x, p):
    b1, b3, bd = _fused_1x1(x, p["_fused1x1"])      # branch1x1 / branch3x3_1 / branch3x3dbl_1
    b3 = jnp.concatenate([conv_bn(b3, p["branch3x3_2a"]),
                          conv_bn(b3, p["branch3x3_2b"])], axis=-1)
    bd = conv_bn(bd, p["branch3x3dbl_2"])
    bd = jnp.concatenate([conv_bn(bd, p["branch3x3dbl_3a"]),
                          conv_bn(bd, p["branch3x3dbl_3b"])], axis=-1)
    bp = conv_bn(_avg_pool_3x3_s1(x), p["branch_pool"])
    return jnp.concatenate([b1, b3, bd, bp], axis=-1)


# ----------------------------------------------------------------------------
# Deterministic synthetic parameters (no checkpoint) and BN folding
# ----------------------------------------------------------------------------
class KeyGen:
    def __init__(self, seed):
        self.key = jax.random.PRNGKey(seed)

    def __call__(self):
        self.key, sub = jax.random.split(self.key)
        return sub


def make_basic_conv(kg, cin, cout, kh, kw, ph=0, pw=0):
    fan_in = cin * kh * kw
    return dict(
        w=jax.random.normal(kg(), (cout, cin, kh, kw), jnp.float32)
        * jnp.sqrt(2.0 / fan_in),
        gamma=1.0 + 0.1 * jax.random.normal(kg(), (cout,), jnp.float32),
        beta=0.05 * jax.random.normal(kg(), (cout,), jnp.float32),
        mean=0.05 * jax.random.normal(kg(), (cout,), jnp.float32),
        var=1.0 + 0.1 * jnp.abs(jax.random.normal(kg(), (cout,), jnp.float32)),
        kh=kh, kw=kw, ph=ph, pw=pw,
    )


def make_inception_a(kg, cin, pool_features):
    return dict(
        branch1x1=make_basic_conv(kg, cin, 64, 1, 1),
        branch5x5_1=make_basic_conv(kg, cin, 48, 1, 1),
        branch5x5_2=make_basic_conv(kg, 48, 64, 5, 5, 2, 2),
        branch3x3dbl_1=make_basic_conv(kg, cin, 64, 1, 1),
        branch3x3dbl_2=make_basic_conv(kg, 64, 96, 3, 3, 1, 1),
        branch3x3dbl_3=make_basic_conv(kg, 96, 96, 3, 3, 1, 1),
        branch_pool=make_basic_conv(kg, cin, pool_features, 1, 1),
    )


def make_inception_b(kg, cin):
    return dict(
        branch3x3=make_basic_conv(kg, cin, 384, 3, 3),
        branch3x3dbl_1=make_basic_conv(kg, cin, 64, 1, 1),
        branch3x3dbl_2=make_basic_conv(kg, 64, 96, 3, 3, 1, 1),
        branch3x3dbl_3=make_basic_conv(kg, 96, 96, 3, 3),
    )


def make_inception_c(kg, cin, c7):
    return dict(
        branch1x1=make_basic_conv(kg, cin, 192, 1, 1),
        branch7x7_1=make_basic_conv(kg, cin, c7, 1, 1),
        branch7x7_2=make_basic_conv(kg, c7, c7, 1, 7, 0, 3),
        branch7x7_3=make_basic_conv(kg, c7, 192, 7, 1, 3, 0),
        branch7x7dbl_1=make_basic_conv(kg, cin, c7, 1, 1),
        branch7x7dbl_2=make_basic_conv(kg, c7, c7, 7, 1, 3, 0),
        branch7x7dbl_3=make_basic_conv(kg, c7, c7, 1, 7, 0, 3),
        branch7x7dbl_4=make_basic_conv(kg, c7, c7, 7, 1, 3, 0),
        branch7x7dbl_5=make_basic_conv(kg, c7, 192, 1, 7, 0, 3),
        branch_pool=make_basic_conv(kg, cin, 192, 1, 1),
    )


def make_inception_d(kg, cin):
    return dict(
        branch3x3_1=make_basic_conv(kg, cin, 192, 1, 1),
        branch3x3_2=make_basic_conv(kg, 192, 320, 3, 3),
        branch7x7x3_1=make_basic_conv(kg, cin, 192, 1, 1),
        branch7x7x3_2=make_basic_conv(kg, 192, 192, 1, 7, 0, 3),
        branch7x7x3_3=make_basic_conv(kg, 192, 192, 7, 1, 3, 0),
        branch7x7x3_4=make_basic_conv(kg, 192, 192, 3, 3),
    )


def make_inception_e(kg, cin):
    return dict(
        branch1x1=make_basic_conv(kg, cin, 320, 1, 1),
        branch3x3_1=make_basic_conv(kg, cin, 384, 1, 1),
        branch3x3_2a=make_basic_conv(kg, 384, 384, 1, 3, 0, 1),
        branch3x3_2b=make_basic_conv(kg, 384, 384, 3, 1, 1, 0),
        branch3x3dbl_1=make_basic_conv(kg, cin, 448, 1, 1),
        branch3x3dbl_2=make_basic_conv(kg, 448, 384, 3, 3, 1, 1),
        branch3x3dbl_3a=make_basic_conv(kg, 384, 384, 1, 3, 0, 1),
        branch3x3dbl_3b=make_basic_conv(kg, 384, 384, 3, 1, 1, 0),
        branch_pool=make_basic_conv(kg, cin, 192, 1, 1),
    )


def make_raw_params(kg, num_classes):
    p = dict(
        Conv2d_1a_3x3=make_basic_conv(kg, 3, 32, 3, 3),
        Conv2d_2a_3x3=make_basic_conv(kg, 32, 32, 3, 3),
        Conv2d_2b_3x3=make_basic_conv(kg, 32, 64, 3, 3, 1, 1),
        Conv2d_3b_1x1=make_basic_conv(kg, 64, 80, 1, 1),
        Conv2d_4a_3x3=make_basic_conv(kg, 80, 192, 3, 3),
        Mixed_5b=make_inception_a(kg, 192, 32),
        Mixed_5c=make_inception_a(kg, 256, 64),
        Mixed_5d=make_inception_a(kg, 288, 64),
        Mixed_6a=make_inception_b(kg, 288),
        Mixed_6b=make_inception_c(kg, 768, 128),
        Mixed_6c=make_inception_c(kg, 768, 160),
        Mixed_6d=make_inception_c(kg, 768, 160),
        Mixed_6e=make_inception_c(kg, 768, 192),
        Mixed_7a=make_inception_d(kg, 768),
        Mixed_7b=make_inception_e(kg, 1280),
        Mixed_7c=make_inception_e(kg, 2048),
    )
    # ClassifierHead(2048, num_classes, [64], activation='relu'):
    # Flatten -> BatchNorm1d(2048) -> Linear(2048, 64) -> ReLU -> Dropout -> Linear(64, nc)
    p["head"] = dict(
        bn_gamma=1.0 + 0.1 * jax.random.normal(kg(), (2048,), jnp.float32),
        bn_beta=0.05 * jax.random.normal(kg(), (2048,), jnp.float32),
        bn_mean=0.05 * jax.random.normal(kg(), (2048,), jnp.float32),
        bn_var=1.0 + 0.1 * jnp.abs(jax.random.normal(kg(), (2048,), jnp.float32)),
        fc1_w=jax.random.normal(kg(), (64, 2048), jnp.float32) / jnp.sqrt(2048.0),
        fc1_b=0.01 * jax.random.normal(kg(), (64,), jnp.float32),
        fc2_w=jax.random.normal(kg(), (num_classes, 64), jnp.float32) / jnp.sqrt(64.0),
        fc2_b=0.01 * jax.random.normal(kg(), (num_classes,), jnp.float32),
    )
    return p


def _fold_conv_bn(p, eps=1e-3):
    """Fold eval-mode BatchNorm2d (eps=0.001 in BasicConv2d) into the conv weight."""
    scale = p["gamma"] / jnp.sqrt(p["var"] + eps)
    wf = p["w"] * scale[:, None, None, None]
    bias = p["beta"] - p["mean"] * scale
    cout, cin, kh, kw = p["w"].shape
    wt = jnp.transpose(wf, (2, 3, 1, 0)).reshape(kh * kw, cin, cout)  # tap-major
    return dict(w=wt.astype(jnp.bfloat16), b=bias.astype(jnp.float32),
                kh=kh, kw=kw, ph=p["ph"], pw=p["pw"], cin=cin, cout=cout)


# Which 1x1 branch heads (reading the same block input) are fused per block type.
_FUSE_1X1 = (
    ("branch5x5_1", ("branch1x1", "branch5x5_1", "branch3x3dbl_1")),      # InceptionA
    ("branch7x7_1", ("branch1x1", "branch7x7_1", "branch7x7dbl_1")),      # InceptionC
    ("branch7x7x3_1", ("branch3x3_1", "branch7x7x3_1")),                  # InceptionD
    ("branch3x3_2a", ("branch1x1", "branch3x3_1", "branch3x3dbl_1")),     # InceptionE
)


def _maybe_add_fused_1x1(block):
    for marker, names in _FUSE_1X1:
        if marker in block:
            block["_fused1x1"] = dict(
                w=jnp.concatenate([block[nm]["w"][0] for nm in names], axis=1),
                b=jnp.concatenate([block[nm]["b"] for nm in names], axis=0),
                sizes=tuple(block[nm]["cout"] for nm in names),
            )
            break
    return block


def prepare_params(raw):
    """One-time BN folding, bf16 weight cast and 1x1-branch fusion."""
    prep = {}
    for name, val in raw.items():
        if name == "head":
            continue
        if "gamma" in val:                       # single BasicConv2d
            prep[name] = _fold_conv_bn(val)
        else:                                    # inception block: dict of BasicConv2d
            prep[name] = _maybe_add_fused_1x1(
                {k: _fold_conv_bn(v) for k, v in val.items()})
    h = raw["head"]
    s = h["bn_gamma"] / jnp.sqrt(h["bn_var"] + 1e-5)
    t = h["bn_beta"] - h["bn_mean"] * s
    prep["head"] = dict(
        fc1_w=(h["fc1_w"] * s[None, :]).T.astype(jnp.bfloat16),   # (2048, 64)
        fc1_b=(h["fc1_b"] + h["fc1_w"] @ t).astype(jnp.float32),
        fc2_w=h["fc2_w"].T.astype(jnp.bfloat16),                  # (64, num_classes)
        fc2_b=h["fc2_b"].astype(jnp.float32),
    )
    return prep


# ----------------------------------------------------------------------------
# Full forward pass (eval mode)
# ----------------------------------------------------------------------------
def inception_v3_forward(params, x_nchw):
    x = _transform_input(x_nchw.astype(jnp.float32))
    x = jnp.transpose(x, (0, 2, 3, 1)).astype(jnp.bfloat16)   # NCHW -> NHWC, bf16

    x = conv_bn(x, params["Conv2d_1a_3x3"], stride=2)
    x = conv_bn(x, params["Conv2d_2a_3x3"])
    x = conv_bn(x, params["Conv2d_2b_3x3"])
    x = _max_pool_3x3_s2(x)
    x = conv_bn(x, params["Conv2d_3b_1x1"])
    x = conv_bn(x, params["Conv2d_4a_3x3"])
    x = _max_pool_3x3_s2(x)

    x = inception_a(x, params["Mixed_5b"])
    x = inception_a(x, params["Mixed_5c"])
    x = inception_a(x, params["Mixed_5d"])
    x = inception_b(x, params["Mixed_6a"])
    x = inception_c(x, params["Mixed_6b"])
    x = inception_c(x, params["Mixed_6c"])
    x = inception_c(x, params["Mixed_6d"])
    x = inception_c(x, params["Mixed_6e"])
    # TODO(synk): AuxLogits branch is training-only in torchvision; eval forward skips it.
    x = inception_d(x, params["Mixed_7a"])
    x = inception_e(x, params["Mixed_7b"])
    x = inception_e(x, params["Mixed_7c"])

    feat = jnp.mean(x.astype(jnp.float32), axis=(1, 2))   # adaptive avg pool -> (N, 2048)
    # Inception's dropout and fc=Identity are identity in eval mode.

    # ClassifierHead (BatchNorm1d folded into the first Linear; Dropout = identity).
    h = _pallas_matmul(feat, params["head"]["fc1_w"], params["head"]["fc1_b"], relu=True)
    out = _pallas_matmul(h, params["head"]["fc2_w"], params["head"]["fc2_b"],
                         relu=False, out_dtype=jnp.float32)
    return out


# ----------------------------------------------------------------------------
if __name__ == "__main__":
    num_classes = 10
    kg = KeyGen(0)
    params = prepare_params(make_raw_params(kg, num_classes))

    # Inception V3's padding-free stem / reduction stages require >= ~75 px input;
    # 80x80 is the smallest convenient test size (299x299 is the canonical one).
    x = jax.random.normal(jax.random.PRNGKey(0), (2, 3, 80, 80), jnp.float32)

    out = inception_v3_forward(params, x)
    out = jax.block_until_ready(out)

    assert out.shape == (2, num_classes), out.shape
    assert bool(jnp.all(jnp.isfinite(out)))
    print("KERNEL_OK")
</pallas_src>

<mosaic_0001>
module attributes {stable_mosaic.version = 11 : i64} {
  func.func @_mm_kernel(%arg0: i32, %arg1: i32, %arg2: i32, %arg3: memref<512x32xbf16, #tpu.memory_space<vmem>>, %arg4: memref<32x128xbf16, #tpu.memory_space<vmem>>, %arg5: memref<1x128xf32, #tpu.memory_space<vmem>>, %arg6: memref<512x128xbf16, #tpu.memory_space<vmem>>) attributes {dimension_semantics = [#tpu.dimension_semantics<parallel>, #tpu.dimension_semantics<parallel>, #tpu.dimension_semantics<arbitrary>], iteration_bounds = array<i64: 6, 1, 1>, scalar_prefetch = 0 : i64, scratch_operands = 0 : i64, tpu.core_type = #tpu.core_type<tc>, window_params = [{transform_indices = @transform_0, window_bounds = array<i64: 512, 32>}, {transform_indices = @transform_1, window_bounds = array<i64: 32, 128>}, {transform_indices = @transform_2, window_bounds = array<i64: 1, 128>}, {transform_indices = @transform_3, window_bounds = array<i64: 512, 128>}]} {
    %c0 = arith.constant 0 : index
    %c0_0 = arith.constant 0 : index
    %0 = vector.load %arg3[%c0, %c0_0] : memref<512x32xbf16, #tpu.memory_space<vmem>>, vector<512x32xbf16>
    %c0_1 = arith.constant 0 : index
    %c0_2 = arith.constant 0 : index
    %1 = vector.load %arg4[%c0_1, %c0_2] : memref<32x128xbf16, #tpu.memory_space<vmem>>, vector<32x128xbf16>
    %cst = arith.constant dense<0.000000e+00> : vector<512x128xf32>
    %2 = tpu.matmul %0, %1, %cst {dimension_numbers = #tpu.dot_dimension_numbers<[1], [0], [0], [1], [0, 0, 1, 1], [], []>} : vector<512x32xbf16>, vector<32x128xbf16>, vector<512x128xf32> -> vector<512x128xf32>
    %c0_3 = arith.constant 0 : index
    %c0_4 = arith.constant 0 : index
    %3 = vector.load %arg5[%c0_3, %c0_4] : memref<1x128xf32, #tpu.memory_space<vmem>>, vector<1x128xf32>
    %4 = vector.broadcast %3 : vector<1x128xf32> to vector<512x128xf32>
    %5 = arith.addf %2, %4 : vector<512x128xf32>
    %cst_5 = arith.constant 0.000000e+00 : f32
    %6 = vector.broadcast %cst_5 : f32 to vector<512x128xf32>
    %7 = arith.maximumf %5, %6 : vector<512x128xf32>
    %8 = arith.truncf %7 : vector<512x128xf32> to vector<512x128xbf16>
    %c0_6 = arith.constant 0 : index
    %c0_7 = arith.constant 0 : index
    %9 = vector.load %arg6[%c0_6, %c0_7] : memref<512x128xbf16, #tpu.memory_space<vmem>>, vector<512x128xbf16>
    tpu.vector_store %arg6[%c0_6, %c0_7], %8 {strides = array<i32>} : memref<512x128xbf16, #tpu.memory_space<vmem>>, vector<512x128xbf16>,
    return
  }
  func.func @transform_0(%arg0: i32, %arg1: i32, %arg2: i32) -> (i32, i32) {
    %c0_i32 = arith.constant 0 : i32
    return %arg0, %arg2 : i32, i32
  }
  func.func @transform_1(%arg0: i32, %arg1: i32, %arg2: i32) -> (i32, i32) {
    %c0_i32 = arith.constant 0 : i32
    return %arg2, %arg1 : i32, i32
  }
  func.func @transform_2(%arg0: i32, %arg1: i32, %arg2: i32) -> (i32, i32) {
    %c0_i32 = arith.constant 0 : i32
    %c0_i32_0 = arith.constant 0 : i32
    return %c0_i32, %arg1 : i32, i32
  }
  func.func @transform_3(%arg0: i32, %arg1: i32, %arg2: i32) -> (i32, i32) {
    %c0_i32 = arith.constant 0 : i32
    return %arg0, %arg1 : i32, i32
  }
}

</mosaic_0001>

<llo_original>
// kernel: tpu_custom_call.1
$region0: #{tpu_custom_call.1}
  #allocation0 [shape = 'u32[]', space=smem, size = 0x4, offset = 0x4, fixed_abs, tag = 'smem constant byte address 0x4 - core index']
  #allocation1 [shape = 'u32[144,128]{1,0:T(1,128)}', space=vmem, size = 0x12000, scoped, tag = 'internal scratch']
  %s0 = inlined_call_operand.vmem [shape: bf16[3042,32], index: 0, kind: input, shape index: {}]
  %s1 = inlined_call_operand.vmem [shape: bf16[32,128], index: 1, kind: input, shape index: {}]
  %s2 = inlined_call_operand.vmem [shape: f32[1,128], index: 2, kind: input, shape index: {}]
  %s3 = inlined_call_operand.hbm [shape: bf16[3042,128], index: 3, kind: output, shape index: {}]
  %s4 = sld [smem:[#allocation0]]
  $region45: #{tpu_custom_call.1} parent=0
    _
  %s6 = ssub.s32 1, %s4
  %s7 = scalar_select 0, %s6, %s4
  $region1: #{tpu_custom_call.1} parent=0
    #allocation2 [shape = 'u8[262144]{0}', space=vmem, size = 0x40000, scoped, tag = 'output window, operand 0']
    #allocation3 [shape = 's32[2]{0}', space=sflag, size = 0x8, scoped, tag = 'scoped memory for tpu_custom_call.1']
    %8 = vsyncpa [#allocation3], 0
    %s9 = scalar_lea.sflag [#allocation3], 1
    %10 = vsyncpa %s9, 0
    loop: start=0, step=1, limit=8
    $region2: #{tpu_custom_call.1} parent=1 // loop_pre_header
      _
    $region3: #{tpu_custom_call.1} parent=1 // loop_header
      %s12 = sphi 0, %s16
      %p13 = scmp.ge.s32.totalorder %s12, 8
      %s19 = sphi 0, %s38
      %s20 = sphi 0, %s34
      %s21 = sphi 0, %s30
      %s22 = sphi 0, %s19
      %s23 = sphi 0, %s20
      %s24 = sphi 0, %s21
      %s25 = sphi 0, %s22
      %s26 = sphi 0, %s23
      %s27 = sphi 0, %s24
      %s43 = sphi 0, %s45
      %s46 = sphi 0, %s43
      %s47 = sphi 0, %s46
      %s63 = sphi 0, %s47
      %s71 = sphi 0, %s73
      %s74 = sphi 0, %s71
      %s75 = sphi 0, %s74
      %s91 = sphi 0, %s75
      %s97 = sphi 0, %s99
      %s100 = sphi 0, %s97
      %s101 = sphi 0, %s100
      %s117 = sphi 0, %s101
      %s125 = sphi 0, %s127
      %s128 = sphi 0, %s125
      %s129 = sphi 0, %s128
      %s145 = sphi 0, %s129
    $region4: #{tpu_custom_call.1} parent=1 // loop_header_branch
      %15 = sbr.rel (%p13) target = $region8
    $region5: #{tpu_custom_call.1} parent=1 // loop_body
      %s17 = ssub.s32 %s12, 1
      %s18 = ssub.s32 %s12, 2
      %s28 = sadd.s32 1, %s21
      %p29 = scmp.ge.s32.totalorder %s28, 1
      %s30 = scalar_select %p29, 0, %s28
      %s31 = sadd.s32 1, %s20
      %s32 = scalar_select %p29, %s31, %s20
      %p33 = scmp.ge.s32.totalorder %s32, 1
      %s34 = scalar_select %p33, 0, %s32
      %s35 = sadd.s32 1, %s19
      %s36 = scalar_select %p33, %s35, %s19
      %p37 = scmp.ge.s32.totalorder %s36, 6
      %s38 = scalar_select %p37, 0, %s36
      %s39 = ssub.s32 %s19, %s38
      %s40 = ssub.s32 %s21, %s30
      %s41 = sor.u32 %s39, %s40
      %p42 = scmp.eq.s32.totalorder %s41, 0
      %s44 = sadd.s32 %s43, 1
      %s45 = scalar_select %p42, %s43, %s44
      %p48 = pneg %p42
      %p49 = scmp.eq.s32.totalorder %s12, 5
      %p50 = por %p48, %p49
      %p51 = scmp.ne.s32.totalorder %s43, %s46
      %p52 = scmp.eq.s32.totalorder %s12, 0
      %p53 = por %p51, %p52
      %p54 = scmp.ne.s32.totalorder %s43, %s46
      %p55 = scmp.eq.s32.totalorder %s17, 5
      %p56 = por %p54, %p55
      %p57 = scmp.ne.s32.totalorder %s46, %s47
      %p58 = scmp.eq.s32.totalorder %s17, 0
      %p59 = por %p57, %p58
      %p60 = scmp.ne.s32.totalorder %s46, %s47
      %p61 = scmp.eq.s32.totalorder %s18, 5
      %p62 = por %p60, %p61
      %p64 = scmp.ne.s32.totalorder %s47, %s63
      %p65 = scmp.eq.s32.totalorder %s18, 0
      %p66 = por %p64, %p65
      %s67 = ssub.s32 %s21, %s30
      %s68 = ssub.s32 %s20, %s34
      %s69 = sor.u32 %s67, %s68
      %p70 = scmp.eq.s32.totalorder %s69, 0
      %s72 = sadd.s32 %s71, 1
      %s73 = scalar_select %p70, %s71, %s72
      %p76 = pneg %p70
      %p77 = scmp.eq.s32.totalorder %s12, 5
      %p78 = por %p76, %p77
      %p79 = scmp.ne.s32.totalorder %s71, %s74
      %p80 = scmp.eq.s32.totalorder %s12, 0
      %p81 = por %p79, %p80
      %p82 = scmp.ne.s32.totalorder %s71, %s74
      %p83 = scmp.eq.s32.totalorder %s17, 5
      %p84 = por %p82, %p83
      %p85 = scmp.ne.s32.totalorder %s74, %s75
      %p86 = scmp.eq.s32.totalorder %s17, 0
      %p87 = por %p85, %p86
      %p88 = scmp.ne.s32.totalorder %s74, %s75
      %p89 = scmp.eq.s32.totalorder %s18, 5
      %p90 = por %p88, %p89
      %p92 = scmp.ne.s32.totalorder %s75, %s91
      %p93 = scmp.eq.s32.totalorder %s18, 0
      %p94 = por %p92, %p93
      %s95 = ssub.s32 %s20, %s34
      %p96 = scmp.eq.s32.totalorder %s95, 0
      %s98 = sadd.s32 %s97, 1
      %s99 = scalar_select %p96, %s97, %s98
      %p102 = pneg %p96
      %p103 = scmp.eq.s32.totalorder %s12, 5
      %p104 = por %p102, %p103
      %p105 = scmp.ne.s32.totalorder %s97, %s100
      %p106 = scmp.eq.s32.totalorder %s12, 0
      %p107 = por %p105, %p106
      %p108 = scmp.ne.s32.totalorder %s97, %s100
      %p109 = scmp.eq.s32.totalorder %s17, 5
      %p110 = por %p108, %p109
      %p111 = scmp.ne.s32.totalorder %s100, %s101
      %p112 = scmp.eq.s32.totalorder %s17, 0
      %p113 = por %p111, %p112
      %p114 = scmp.ne.s32.totalorder %s100, %s101
      %p115 = scmp.eq.s32.totalorder %s18, 5
      %p116 = por %p114, %p115
      %p118 = scmp.ne.s32.totalorder %s101, %s117
      %p119 = scmp.eq.s32.totalorder %s18, 0
      %p120 = por %p118, %p119
      %s121 = ssub.s32 %s19, %s38
      %s122 = ssub.s32 %s20, %s34
      %s123 = sor.u32 %s121, %s122
      %p124 = scmp.eq.s32.totalorder %s123, 0
      %s126 = sadd.s32 %s125, 1
      %s127 = scalar_select %p124, %s125, %s126
      %p130 = pneg %p124
      %p131 = scmp.eq.s32.totalorder %s12, 5
      %p132 = por %p130, %p131
      %p133 = scmp.ne.s32.totalorder %s125, %s128
      %p134 = scmp.eq.s32.totalorder %s12, 0
      %p135 = por %p133, %p134
      %p136 = scmp.ne.s32.totalorder %s125, %s128
      %p137 = scmp.eq.s32.totalorder %s17, 5
      %p138 = por %p136, %p137
      %p139 = scmp.ne.s32.totalorder %s128, %s129
      %p140 = scmp.eq.s32.totalorder %s17, 0
      %p141 = por %p139, %p140
      %p142 = scmp.ne.s32.totalorder %s128, %s129
      %p143 = scmp.eq.s32.totalorder %s18, 5
      %p144 = por %p142, %p143
      %p146 = scmp.ne.s32.totalorder %s129, %s145
      %p147 = scmp.eq.s32.totalorder %s18, 0
      %p148 = por %p146, %p147
      %p149 = scmp.le.s32.totalorder 1, %s12
      %p150 = scmp.lt.s32.totalorder %s12, 7
      %p151 = pnand %p149, %p150
      %p152 = pneg %p151
      // Predicated region
      $region9: #{tpu_custom_call.1} parent=5 // pred_check
        _
      $region10: #{tpu_custom_call.1} parent=5 // pred_check_branch
        %154 = sbr.rel (%p151) target = $region12
      $region11: #{tpu_custom_call.1} parent=5 // pred_region
        %s155 = ssub.s32 %s12, 1
        // Predicated region
        $region13: #{tpu_custom_call.1} parent=11 // pred_check
          %p156 = pneg %p87
        $region14: #{tpu_custom_call.1} parent=11 // pred_check_branch
          %158 = sbr.rel (%p156) target = $region16
        $region15: #{tpu_custom_call.1} parent=11 // pred_region
          %s159 = smul.u32 4, %s24
          %p160 = scmp.lt.s32.totalorder %s159, 3
          %s161 = scalar_select %p160, %s159, 3
          %p162 = scmp.lt.s32.totalorder %s23, 0
          %s163 = scalar_select %p162, %s23, 0
          %s164 = sadd.s32 %s163, %s161
          %s165 = smul.addr %s164, 4
          %s166 = scalar_lea.vmem %s1, %s165
          %s167 = smul.u32 4, %s24
        $region16: #{tpu_custom_call.1} parent=11 // pred_fallthru
          _
        // Predicated region
        $region17: #{tpu_custom_call.1} parent=11 // pred_check
          %p168 = pneg %p113
        $region18: #{tpu_custom_call.1} parent=11 // pred_check_branch
          %170 = sbr.rel (%p168) target = $region20
        $region19: #{tpu_custom_call.1} parent=11 // pred_region
          %p171 = scmp.lt.s32.totalorder %s23, 0
          %s172 = scalar_select %p171, %s23, 0
          %s173 = scalar_lea.vmem %s2, %s172
        $region20: #{tpu_custom_call.1} parent=11 // pred_fallthru
          _
      $region12: #{tpu_custom_call.1} parent=5 // pred_fallthru
        _
      %p174 = scmp.lt.s32.totalorder %s12, 6
      // Predicated region
      $region21: #{tpu_custom_call.1} parent=5 // pred_check
        %p175 = pneg %p174
      $region22: #{tpu_custom_call.1} parent=5 // pred_check_branch
        %177 = sbr.rel (%p175) target = $region24
      $region23: #{tpu_custom_call.1} parent=5 // pred_region
        // Predicated region
        $region25: #{tpu_custom_call.1} parent=23 // pred_check
          %p178 = pneg %p53
        $region26: #{tpu_custom_call.1} parent=23 // pred_check_branch
          %180 = sbr.rel (%p178) target = $region28
        $region27: #{tpu_custom_call.1} parent=23 // pred_region
          %s181 = smul.u32 64, %s19
          %s182 = ssub.s32 381, %s181
          %p183 = scmp.lt.s32.totalorder %s182, 64
          %s184 = scalar_select %p183, %s182, 64
          %s185 = smul.u32 64, %s184
          %p186 = scmp.lt.s32.totalorder %s181, 380
          %s187 = scalar_select %p186, %s181, 380
          %p188 = scmp.lt.s32.totalorder %s21, 0
          %s189 = scalar_select %p188, %s21, 0
          %s190 = sadd.s32 %s189, %s187
          %s191 = smul.addr %s190, 4
          %s192 = scalar_lea.vmem %s0, %s191
          %s193 = smul.u32 64, %s19
          %s194 = ssub.s32 381, %s193
          %p195 = scmp.lt.s32.totalorder %s194, 64
          %s196 = scalar_select %p195, %s194, 64
          %s197 = smul.u32 64, %s196
        $region28: #{tpu_custom_call.1} parent=23 // pred_fallthru
          _
      $region24: #{tpu_custom_call.1} parent=5 // pred_fallthru
        _
      %p198 = scmp.le.s32.totalorder 1, %s12
      %p199 = scmp.lt.s32.totalorder %s12, 7
      %p200 = pnand %p198, %p199
      %p201 = pneg %p200
      // Predicated region
      $region29: #{tpu_custom_call.1} parent=5 // pred_check
        _
      $region30: #{tpu_custom_call.1} parent=5 // pred_check_branch
        %203 = sbr.rel (%p200) target = $region32
      $region31: #{tpu_custom_call.1} parent=5 // pred_region
        %s204 = ssub.s32 %s12, 1
        %s205 = smul.u32 64, %s22
        %s206 = ssub.s32 381, %s205
        %p207 = scmp.lt.s32.totalorder %s206, 64
        %s208 = scalar_select %p207, %s206, 64
        %s209 = smul.u32 64, %s208
        %p210 = scmp.lt.s32.totalorder %s205, 380
        %s211 = scalar_select %p210, %s205, 380
        %p212 = scmp.lt.s32.totalorder %s24, 0
        %s213 = scalar_select %p212, %s24, 0
        %s214 = sadd.s32 %s213, %s211
        %s215 = smul.addr %s214, 4
        %s216 = scalar_lea.vmem %s0, %s215
        %p217 = pneg %p59
        %p218 = pneg %p56
        %s219 = smul.u32 4, %s24
        %p220 = scmp.lt.s32.totalorder %s219, 3
        %s221 = scalar_select %p220, %s219, 3
        %p222 = scmp.lt.s32.totalorder %s23, 0
        %s223 = scalar_select %p222, %s23, 0
        %s224 = sadd.s32 %s223, %s221
        %s225 = smul.addr %s224, 4
        %s226 = scalar_lea.vmem %s1, %s225
        %p227 = pneg %p87
        %p228 = pneg %p84
        %p229 = scmp.lt.s32.totalorder %s23, 0
        %s230 = scalar_select %p229, %s23, 0
        %s231 = scalar_lea.vmem %s2, %s230
        %p232 = pneg %p113
        %p233 = pneg %p110
        %p234 = pneg %p141
        %p235 = pneg %p138
        %s236 = sand.u32 %s128, 1
        %s237 = scalar_lea.sflag [#allocation3], %s236
        %s238 = sand.u32 %s128, 1
        %s239 = smul.addr %s238, 256
        %s240 = scalar_lea.vmem [#allocation2], %s239
        %s241 = smul.u32 64, %s22
        %s242 = ssub.s32 381, %s241
        %p243 = scmp.lt.s32.totalorder %s242, 64
        %s244 = scalar_select %p243, %s242, 64
        %s245 = smul.u32 64, %s244
        %p246 = scmp.lt.s32.totalorder %s241, 380
        %s247 = scalar_select %p246, %s241, 380
        %p248 = scmp.lt.s32.totalorder %s24, 0
        %s249 = scalar_select %p248, %s24, 0
        %s250 = sadd.s32 %s249, %s247
        %s251 = smul.addr %s250, 4
        %s252 = scalar_lea.vmem %s0, %s251
        %s253 = smul.u32 64, %s22
        %s254 = ssub.s32 381, %s253
        %p255 = scmp.lt.s32.totalorder %s254, 64
        %s256 = scalar_select %p255, %s254, 64
        %s257 = smul.u32 64, %s256
        %s258 = smul.u32 4, %s24
        %p259 = scmp.lt.s32.totalorder %s258, 3
        %s260 = scalar_select %p259, %s258, 3
        %p261 = scmp.lt.s32.totalorder %s23, 0
        %s262 = scalar_select %p261, %s23, 0
        %s263 = sadd.s32 %s262, %s260
        %s264 = smul.addr %s263, 4
        %s265 = scalar_lea.vmem %s1, %s264
        %s266 = smul.u32 4, %s24
        %p267 = scmp.lt.s32.totalorder %s23, 0
        %s268 = scalar_select %p267, %s23, 0
        %s269 = scalar_lea.vmem %s2, %s268
        %s270 = smul.u32 64, %s22
        %s271 = ssub.s32 381, %s270
        %p272 = scmp.lt.s32.totalorder %s271, 64
        %s273 = scalar_select %p272, %s271, 64
        %s274 = smul.u32 64, %s273
        %v276 = vld [vmem:[%s252] sm:$0xf]
        %v277 = vld [vmem:[%s252 + $0x4] sm:$0xf]
        %v278 = vld [vmem:[%s252 + $0x8] sm:$0xf]
        %v279 = vld [vmem:[%s252 + $0xc] sm:$0xf]
        %v280 = vld [vmem:[%s252 + $0x10] sm:$0xf]
        %v281 = vld [vmem:[%s252 + $0x14] sm:$0xf]
        %v282 = vld [vmem:[%s252 + $0x18] sm:$0xf]
        %v283 = vld [vmem:[%s252 + $0x1c] sm:$0xf]
        %v284 = vld [vmem:[%s252 + $0x20] sm:$0xf]
        %v285 = vld [vmem:[%s252 + $0x24] sm:$0xf]
        %v286 = vld [vmem:[%s252 + $0x28] sm:$0xf]
        %v287 = vld [vmem:[%s252 + $0x2c] sm:$0xf]
        %v288 = vld [vmem:[%s252 + $0x30] sm:$0xf]
        %v289 = vld [vmem:[%s252 + $0x34] sm:$0xf]
        %v290 = vld [vmem:[%s252 + $0x38] sm:$0xf]
        %v291 = vld [vmem:[%s252 + $0x3c] sm:$0xf]
        %v292 = vld [vmem:[%s252 + $0x40] sm:$0xf]
        %v293 = vld [vmem:[%s252 + $0x44] sm:$0xf]
        %v294 = vld [vmem:[%s252 + $0x48] sm:$0xf]
        %v295 = vld [vmem:[%s252 + $0x4c] sm:$0xf]
        %v296 = vld [vmem:[%s252 + $0x50] sm:$0xf]
        %v297 = vld [vmem:[%s252 + $0x54] sm:$0xf]
        %v298 = vld [vmem:[%s252 + $0x58] sm:$0xf]
        %v299 = vld [vmem:[%s252 + $0x5c] sm:$0xf]
        %v300 = vld [vmem:[%s252 + $0x60] sm:$0xf]
        %v301 = vld [vmem:[%s252 + $0x64] sm:$0xf]
        %v302 = vld [vmem:[%s252 + $0x68] sm:$0xf]
        %v303 = vld [vmem:[%s252 + $0x6c] sm:$0xf]
        %v304 = vld [vmem:[%s252 + $0x70] sm:$0xf]
        %v305 = vld [vmem:[%s252 + $0x74] sm:$0xf]
        %v306 = vld [vmem:[%s252 + $0x78] sm:$0xf]
        %v307 = vld [vmem:[%s252 + $0x7c] sm:$0xf]
        %v308 = vld [vmem:[%s252 + $0x80] sm:$0xf]
        %v309 = vld [vmem:[%s252 + $0x84] sm:$0xf]
        %v310 = vld [vmem:[%s252 + $0x88] sm:$0xf]
        %v311 = vld [vmem:[%s252 + $0x8c] sm:$0xf]
        %v312 = vld [vmem:[%s252 + $0x90] sm:$0xf]
        %v313 = vld [vmem:[%s252 + $0x94] sm:$0xf]
        %v314 = vld [vmem:[%s252 + $0x98] sm:$0xf]
        %v315 = vld [vmem:[%s252 + $0x9c] sm:$0xf]
        %v316 = vld [vmem:[%s252 + $0xa0] sm:$0xf]
        %v317 = vld [vmem:[%s252 + $0xa4] sm:$0xf]
        %v318 = vld [vmem:[%s252 + $0xa8] sm:$0xf]
        %v319 = vld [vmem:[%s252 + $0xac] sm:$0xf]
        %v320 = vld [vmem:[%s252 + $0xb0] sm:$0xf]
        %v321 = vld [vmem:[%s252 + $0xb4] sm:$0xf]
        %v322 = vld [vmem:[%s252 + $0xb8] sm:$0xf]
        %v323 = vld [vmem:[%s252 + $0xbc] sm:$0xf]
        %v324 = vld [vmem:[%s252 + $0xc0] sm:$0xf]
        %v325 = vld [vmem:[%s252 + $0xc4] sm:$0xf]
        %v326 = vld [vmem:[%s252 + $0xc8] sm:$0xf]
        %v327 = vld [vmem:[%s252 + $0xcc] sm:$0xf]
        %v328 = vld [vmem:[%s252 + $0xd0] sm:$0xf]
        %v329 = vld [vmem:[%s252 + $0xd4] sm:$0xf]
        %v330 = vld [vmem:[%s252 + $0xd8] sm:$0xf]
        %v331 = vld [vmem:[%s252 + $0xdc] sm:$0xf]
        %v332 = vld [vmem:[%s252 + $0xe0] sm:$0xf]
        %v333 = vld [vmem:[%s252 + $0xe4] sm:$0xf]
        %v334 = vld [vmem:[%s252 + $0xe8] sm:$0xf]
        %v335 = vld [vmem:[%s252 + $0xec] sm:$0xf]
        %v336 = vld [vmem:[%s252 + $0xf0] sm:$0xf]
        %v337 = vld [vmem:[%s252 + $0xf4] sm:$0xf]
        %v338 = vld [vmem:[%s252 + $0xf8] sm:$0xf]
        %v339 = vld [vmem:[%s252 + $0xfc] sm:$0xf]
        %v340 = vld [vmem:[%s265] sm:$0xf]
        %v341 = vld [vmem:[%s265 + $0x4] sm:$0xf]
        %v342 = vld [vmem:[%s265 + $0x8] sm:$0xf]
        %v343 = vld [vmem:[%s265 + $0xc] sm:$0xf]
        %v344 = vld [vmem:[%s269] sm:$0x1]
        %v346 = vlaneseq
        %v347 = vshrl.u32 %v346, 7
        %v348 = vsub.s32 0, %v347
        %v349 = vrot.slane %v344, %v348
        %v415 = vunpack.c.l.b16 %v276
        %v416 = vunpack.c.l.b16 %v277
        %v417 = vunpack.c.l.b16 %v278
        %v418 = vunpack.c.l.b16 %v279
        %v419 = vunpack.c.l.b16 %v280
        %v420 = vunpack.c.l.b16 %v281
        %v421 = vunpack.c.l.b16 %v282
        %v422 = vunpack.c.l.b16 %v283
        %v423 = vunpack.c.l.b16 %v284
        %v424 = vunpack.c.l.b16 %v285
        %v425 = vunpack.c.l.b16 %v286
        %v426 = vunpack.c.l.b16 %v287
        %v427 = vunpack.c.l.b16 %v288
        %v428 = vunpack.c.l.b16 %v289
        %v429 = vunpack.c.l.b16 %v290
        %v430 = vunpack.c.l.b16 %v291
        %v431 = vunpack.c.l.b16 %v292
        %v432 = vunpack.c.l.b16 %v293
        %v433 = vunpack.c.l.b16 %v294
        %v434 = vunpack.c.l.b16 %v295
        %v435 = vunpack.c.l.b16 %v296
        %v436 = vunpack.c.l.b16 %v297
        %v437 = vunpack.c.l.b16 %v298
        %v438 = vunpack.c.l.b16 %v299
        %v439 = vunpack.c.l.b16 %v300
        %v440 = vunpack.c.l.b16 %v301
        %v441 = vunpack.c.l.b16 %v302
        %v442 = vunpack.c.l.b16 %v303
        %v443 = vunpack.c.l.b16 %v304
        %v444 = vunpack.c.l.b16 %v305
        %v445 = vunpack.c.l.b16 %v306
        %v446 = vunpack.c.l.b16 %v307
        %v447 = vunpack.c.l.b16 %v308
        %v448 = vunpack.c.l.b16 %v309
        %v449 = vunpack.c.l.b16 %v310
        %v450 = vunpack.c.l.b16 %v311
        %v451 = vunpack.c.l.b16 %v312
        %v452 = vunpack.c.l.b16 %v313
        %v453 = vunpack.c.l.b16 %v314
        %v454 = vunpack.c.l.b16 %v315
        %v455 = vunpack.c.l.b16 %v316
        %v456 = vunpack.c.l.b16 %v317
        %v457 = vunpack.c.l.b16 %v318
        %v458 = vunpack.c.l.b16 %v319
        %v459 = vunpack.c.l.b16 %v320
        %v460 = vunpack.c.l.b16 %v321
        %v461 = vunpack.c.l.b16 %v322
        %v462 = vunpack.c.l.b16 %v323
        %v463 = vunpack.c.l.b16 %v324
        %v464 = vunpack.c.l.b16 %v325
        %v465 = vunpack.c.l.b16 %v326
        %v466 = vunpack.c.l.b16 %v327
        %v467 = vunpack.c.l.b16 %v328
        %v468 = vunpack.c.l.b16 %v329
        %v469 = vunpack.c.l.b16 %v330
        %v470 = vunpack.c.l.b16 %v331
        %v471 = vunpack.c.l.b16 %v332
        %v472 = vunpack.c.l.b16 %v333
        %v473 = vunpack.c.l.b16 %v334
        %v474 = vunpack.c.l.b16 %v335
        %v475 = vunpack.c.l.b16 %v336
        %v476 = vunpack.c.l.b16 %v337
        %v477 = vunpack.c.l.b16 %v338
        %v478 = vunpack.c.l.b16 %v339
        %v479 = vpack.c.b16 %v416, %v415
        %v480 = vpack.c.b16 %v418, %v417
        %v481 = vpack.c.b16 %v420, %v419
        %v482 = vpack.c.b16 %v422, %v421
        %v483 = vpack.c.b16 %v424, %v423
        %v484 = vpack.c.b16 %v426, %v425
        %v485 = vpack.c.b16 %v428, %v427
        %v486 = vpack.c.b16 %v430, %v429
        %v487 = vpack.c.b16 %v432, %v431
        %v488 = vpack.c.b16 %v434, %v433
        %v489 = vpack.c.b16 %v436, %v435
        %v490 = vpack.c.b16 %v438, %v437
        %v491 = vpack.c.b16 %v440, %v439
        %v492 = vpack.c.b16 %v442, %v441
        %v493 = vpack.c.b16 %v444, %v443
        %v494 = vpack.c.b16 %v446, %v445
        %v495 = vpack.c.b16 %v448, %v447
        %v496 = vpack.c.b16 %v450, %v449
        %v497 = vpack.c.b16 %v452, %v451
        %v498 = vpack.c.b16 %v454, %v453
        %v499 = vpack.c.b16 %v456, %v455
        %v500 = vpack.c.b16 %v458, %v457
        %v501 = vpack.c.b16 %v460, %v459
        %v502 = vpack.c.b16 %v462, %v461
        %v503 = vpack.c.b16 %v464, %v463
        %v504 = vpack.c.b16 %v466, %v465
        %v505 = vpack.c.b16 %v468, %v467
        %v506 = vpack.c.b16 %v470, %v469
        %v507 = vpack.c.b16 %v472, %v471
        %v508 = vpack.c.b16 %v474, %v473
        %v509 = vpack.c.b16 %v476, %v475
        %v510 = vpack.c.b16 %v478, %v477
        %v515 = vunpack.c.l.b16 %v340
        %v516 = vunpack.c.l.b16 %v341
        %v517 = vunpack.c.l.b16 %v342
        %v518 = vunpack.c.l.b16 %v343
        %v519 = vpack.c.b16 %v516, %v515
        %v520 = vpack.c.b16 %v518, %v517
        %vm523 = vcmask 261120
        %v525 = vsel %vm523, %v479, 0
        %v528 = vsel %vm523, %v480, 0
        %v531 = vsel %vm523, %v481, 0
        %v534 = vsel %vm523, %v482, 0
        %v537 = vsel %vm523, %v483, 0
        %v540 = vsel %vm523, %v484, 0
        %v543 = vsel %vm523, %v485, 0
        %v546 = vsel %vm523, %v486, 0
        %v549 = vsel %vm523, %v487, 0
        %v552 = vsel %vm523, %v488, 0
        %v555 = vsel %vm523, %v489, 0
        %v558 = vsel %vm523, %v490, 0
        %v561 = vsel %vm523, %v491, 0
        %v564 = vsel %vm523, %v492, 0
        %v567 = vsel %vm523, %v493, 0
        %v570 = vsel %vm523, %v494, 0
        %v573 = vsel %vm523, %v495, 0
        %v576 = vsel %vm523, %v496, 0
        %v579 = vsel %vm523, %v497, 0
        %v582 = vsel %vm523, %v498, 0
        %v585 = vsel %vm523, %v499, 0
        %v588 = vsel %vm523, %v500, 0
        %v591 = vsel %vm523, %v501, 0
        %v594 = vsel %vm523, %v502, 0
        %v597 = vsel %vm523, %v503, 0
        %v600 = vsel %vm523, %v504, 0
        %v603 = vsel %vm523, %v505, 0
        %v606 = vsel %vm523, %v506, 0
        %v609 = vsel %vm523, %v507, 0
        %v612 = vsel %vm523, %v508, 0
        %v615 = vsel %vm523, %v509, 0
        %v618 = vsel %vm523, %v510, 0
        %620 = vmatprep.subr.bf16.mxu0 0
        %621 = vmatpush1.bf16.msra.mxu0 %v519
        %622 = vmatprep.subr.bf16.mxu0 0
        %623 = vmatpush1.bf16.msra.mxu0 %v520
        %624 = vmatprep.subr.bf16.mxu0 0
        %625 = vmatpush1.bf16.msra.mxu0 0
        %626 = vmatprep.subr.bf16.mxu0 0
        %627 = vmatpush1.bf16.msra.mxu0 0
        %628 = vmatprep.subr.bf16.mxu0 0
        %629 = vmatpush1.bf16.msra.mxu0 0
        %630 = vmatprep.subr.bf16.mxu0 0
        %631 = vmatpush1.bf16.msra.mxu0 0
        %632 = vmatprep.subr.bf16.mxu0 0
        %633 = vmatpush1.bf16.msra.mxu0 0
        %634 = vmatprep.subr.bf16.mxu0 0
        %635 = vmatpush1.bf16.msra.mxu0 0
        %636 = vmatprep.subr.bf16.mxu0 0
        %637 = vmatpush1.bf16.msra.mxu0 0
        %638 = vmatprep.subr.bf16.mxu0 0
        %639 = vmatpush1.bf16.msra.mxu0 0
        %640 = vmatprep.subr.bf16.mxu0 0
        %641 = vmatpush1.bf16.msra.mxu0 0
        %642 = vmatprep.subr.bf16.mxu0 0
        %643 = vmatpush1.bf16.msra.mxu0 0
        %644 = vmatprep.subr.bf16.mxu0 0
        %645 = vmatpush1.bf16.msra.mxu0 0
        %646 = vmatprep.subr.bf16.mxu0 0
        %647 = vmatpush1.bf16.msra.mxu0 0
        %648 = vmatprep.subr.bf16.mxu0 0
        %649 = vmatpush1.bf16.msra.mxu0 0
        %650 = vmatprep.subr.bf16.mxu0 0
        %651 = vmatpush1.bf16.msra.mxu0 0
        %652 = vmatprep.mubr.bf16.mxu0 0
        %653 = vmatmul.mubr.bf16.gmra.mrb[0].mxu0 %v525
        %v654 = vpop.f32.mrb[0].mxu0
        %v655 = vadd.f32 %v349, %v654
        %v656 = vpop.f32.mrb[0].mxu0
        %v657 = vpop.f32.mrb[0].mxu0
        %v658 = vadd.f32 %v349, %v657
        %v659 = vpop.f32.mrb[0].mxu0
        %660 = vmatprep.mubr.bf16.mxu0 0
        %661 = vmatmul.mubr.bf16.gmra.mrb[0].mxu0 %v528
        %v662 = vpop.f32.mrb[0].mxu0
        %v663 = vadd.f32 %v349, %v662
        %v664 = vpop.f32.mrb[0].mxu0
        %v665 = vpop.f32.mrb[0].mxu0
        %v666 = vadd.f32 %v349, %v665
        %v667 = vpop.f32.mrb[0].mxu0
        %668 = vmatprep.mubr.bf16.mxu0 0
        %669 = vmatmul.mubr.bf16.gmra.mrb[0].mxu0 %v531
        %v670 = vpop.f32.mrb[0].mxu0
        %v671 = vadd.f32 %v349, %v670
        %v672 = vpop.f32.mrb[0].mxu0
        %v673 = vpop.f32.mrb[0].mxu0
        %v674 = vadd.f32 %v349, %v673
        %v675 = vpop.f32.mrb[0].mxu0
        %676 = vmatprep.mubr.bf16.mxu0 0
        %677 = vmatmul.mubr.bf16.gmra.mrb[0].mxu0 %v534
        %v678 = vpop.f32.mrb[0].mxu0
        %v679 = vadd.f32 %v349, %v678
        %v680 = vpop.f32.mrb[0].mxu0
        %v681 = vpop.f32.mrb[0].mxu0
        %v682 = vadd.f32 %v349, %v681
        %v683 = vpop.f32.mrb[0].mxu0
        %684 = vmatprep.mubr.bf16.mxu0 0
        %685 = vmatmul.mubr.bf16.gmra.mrb[0].mxu0 %v537
        %v686 = vpop.f32.mrb[0].mxu0
        %v687 = vadd.f32 %v349, %v686
        %v688 = vpop.f32.mrb[0].mxu0
        %v689 = vpop.f32.mrb[0].mxu0
        %v690 = vadd.f32 %v349, %v689
        %v691 = vpop.f32.mrb[0].mxu0
        %692 = vmatprep.mubr.bf16.mxu0 0
        %693 = vmatmul.mubr.bf16.gmra.mrb[0].mxu0 %v540
        %v694 = vpop.f32.mrb[0].mxu0
        %v695 = vadd.f32 %v349, %v694
        %v696 = vpop.f32.mrb[0].mxu0
        %v697 = vpop.f32.mrb[0].mxu0
        %v698 = vadd.f32 %v349, %v697
        %v699 = vpop.f32.mrb[0].mxu0
        %700 = vmatprep.mubr.bf16.mxu0 0
        %701 = vmatmul.mubr.bf16.gmra.mrb[0].mxu0 %v543
        %v702 = vpop.f32.mrb[0].mxu0
        %v703 = vadd.f32 %v349, %v702
        %v704 = vpop.f32.mrb[0].mxu0
        %v705 = vpop.f32.mrb[0].mxu0
        %v706 = vadd.f32 %v349, %v705
        %v707 = vpop.f32.mrb[0].mxu0
        %708 = vmatprep.mubr.bf16.mxu0 0
        %709 = vmatmul.mubr.bf16.gmra.mrb[0].mxu0 %v546
        %v710 = vpop.f32.mrb[0].mxu0
        %v711 = vadd.f32 %v349, %v710
        %v712 = vpop.f32.mrb[0].mxu0
        %v713 = vpop.f32.mrb[0].mxu0
        %v714 = vadd.f32 %v349, %v713
        %v715 = vpop.f32.mrb[0].mxu0
        %716 = vmatprep.mubr.bf16.mxu0 0
        %717 = vmatmul.mubr.bf16.gmra.mrb[0].mxu0 %v549
        %v718 = vpop.f32.mrb[0].mxu0
        %v719 = vadd.f32 %v349, %v718
        %v720 = vpop.f32.mrb[0].mxu0
        %v721 = vpop.f32.mrb[0].mxu0
        %v722 = vadd.f32 %v349, %v721
        %v723 = vpop.f32.mrb[0].mxu0
        %724 = vmatprep.mubr.bf16.mxu0 0
        %725 = vmatmul.mubr.bf16.gmra.mrb[0].mxu0 %v552
        %v726 = vpop.f32.mrb[0].mxu0
        %v727 = vadd.f32 %v349, %v726
        %v728 = vpop.f32.mrb[0].mxu0
        %v729 = vpop.f32.mrb[0].mxu0
        %v730 = vadd.f32 %v349, %v729
        %v731 = vpop.f32.mrb[0].mxu0
        %732 = vmatprep.mubr.bf16.mxu0 0
        %733 = vmatmul.mubr.bf16.gmra.mrb[0].mxu0 %v555
        %v734 = vpop.f32.mrb[0].mxu0
        %v735 = vadd.f32 %v349, %v734
        %v736 = vpop.f32.mrb[0].mxu0
        %v737 = vpop.f32.mrb[0].mxu0
        %v738 = vadd.f32 %v349, %v737
        %v739 = vpop.f32.mrb[0].mxu0
        %740 = vmatprep.mubr.bf16.mxu0 0
        %741 = vmatmul.mubr.bf16.gmra.mrb[0].mxu0 %v558
        %v742 = vpop.f32.mrb[0].mxu0
        %v743 = vadd.f32 %v349, %v742
        %v744 = vpop.f32.mrb[0].mxu0
        %v745 = vpop.f32.mrb[0].mxu0
        %v746 = vadd.f32 %v349, %v745
        %v747 = vpop.f32.mrb[0].mxu0
        %748 = vmatprep.mubr.bf16.mxu0 0
        %749 = vmatmul.mubr.bf16.gmra.mrb[0].mxu0 %v561
        %v750 = vpop.f32.mrb[0].mxu0
        %v751 = vadd.f32 %v349, %v750
        %v752 = vpop.f32.mrb[0].mxu0
        %v753 = vpop.f32.mrb[0].mxu0
        %v754 = vadd.f32 %v349, %v753
        %v755 = vpop.f32.mrb[0].mxu0
        %756 = vmatprep.mubr.bf16.mxu0 0
        %757 = vmatmul.mubr.bf16.gmra.mrb[0].mxu0 %v564
        %v758 = vpop.f32.mrb[0].mxu0
        %v759 = vadd.f32 %v349, %v758
        %v760 = vpop.f32.mrb[0].mxu0
        %v761 = vpop.f32.mrb[0].mxu0
        %v762 = vadd.f32 %v349, %v761
        %v763 = vpop.f32.mrb[0].mxu0
        %764 = vmatprep.mubr.bf16.mxu0 0
        %765 = vmatmul.mubr.bf16.gmra.mrb[0].mxu0 %v567
        %v766 = vpop.f32.mrb[0].mxu0
        %v767 = vadd.f32 %v349, %v766
        %v768 = vpop.f32.mrb[0].mxu0
        %v769 = vpop.f32.mrb[0].mxu0
        %v770 = vadd.f32 %v349, %v769
        %v771 = vpop.f32.mrb[0].mxu0
        %772 = vmatprep.mubr.bf16.mxu0 0
        %773 = vmatmul.mubr.bf16.gmra.mrb[0].mxu0 %v570
        %v774 = vpop.f32.mrb[0].mxu0
        %v775 = vadd.f32 %v349, %v774
        %v776 = vpop.f32.mrb[0].mxu0
        %v777 = vpop.f32.mrb[0].mxu0
        %v778 = vadd.f32 %v349, %v777
        %v779 = vpop.f32.mrb[0].mxu0
        %780 = vmatprep.mubr.bf16.mxu0 0
        %781 = vmatmul.mubr.bf16.gmra.mrb[0].mxu0 %v573
        %v782 = vpop.f32.mrb[0].mxu0
        %v783 = vadd.f32 %v349, %v782
        %v784 = vpop.f32.mrb[0].mxu0
        %v785 = vpop.f32.mrb[0].mxu0
        %v786 = vadd.f32 %v349, %v785
        %v787 = vpop.f32.mrb[0].mxu0
        %788 = vmatprep.mubr.bf16.mxu0 0
        %789 = vmatmul.mubr.bf16.gmra.mrb[0].mxu0 %v576
        %v790 = vpop.f32.mrb[0].mxu0
        %v791 = vadd.f32 %v349, %v790
        %v792 = vpop.f32.mrb[0].mxu0
        %v793 = vpop.f32.mrb[0].mxu0
        %v794 = vadd.f32 %v349, %v793
        %v795 = vpop.f32.mrb[0].mxu0
        %796 = vmatprep.mubr.bf16.mxu0 0
        %797 = vmatmul.mubr.bf16.gmra.mrb[0].mxu0 %v579
        %v798 = vpop.f32.mrb[0].mxu0
        %v799 = vadd.f32 %v349, %v798
        %v800 = vpop.f32.mrb[0].mxu0
        %v801 = vpop.f32.mrb[0].mxu0
        %v802 = vadd.f32 %v349, %v801
        %v803 = vpop.f32.mrb[0].mxu0
        %804 = vmatprep.mubr.bf16.mxu0 0
        %805 = vmatmul.mubr.bf16.gmra.mrb[0].mxu0 %v582
        %v806 = vpop.f32.mrb[0].mxu0
        %v807 = vadd.f32 %v349, %v806
        %v808 = vpop.f32.mrb[0].mxu0
        %v809 = vpop.f32.mrb[0].mxu0
        %v810 = vadd.f32 %v349, %v809
        %v811 = vpop.f32.mrb[0].mxu0
        %812 = vmatprep.mubr.bf16.mxu0 0
        %813 = vmatmul.mubr.bf16.gmra.mrb[0].mxu0 %v585
        %v814 = vpop.f32.mrb[0].mxu0
        %v815 = vadd.f32 %v349, %v814
        %v816 = vpop.f32.mrb[0].mxu0
        %v817 = vpop.f32.mrb[0].mxu0
        %v818 = vadd.f32 %v349, %v817
        %v819 = vpop.f32.mrb[0].mxu0
        %820 = vmatprep.mubr.bf16.mxu0 0
        %821 = vmatmul.mubr.bf16.gmra.mrb[0].mxu0 %v588
        %v822 = vpop.f32.mrb[0].mxu0
        %v823 = vadd.f32 %v349, %v822
        %v824 = vpop.f32.mrb[0].mxu0
        %v825 = vpop.f32.mrb[0].mxu0
        %v826 = vadd.f32 %v349, %v825
        %v827 = vpop.f32.mrb[0].mxu0
        %828 = vmatprep.mubr.bf16.mxu0 0
        %829 = vmatmul.mubr.bf16.gmra.mrb[0].mxu0 %v591
        %v830 = vpop.f32.mrb[0].mxu0
        %v831 = vadd.f32 %v349, %v830
        %v832 = vpop.f32.mrb[0].mxu0
        %v833 = vpop.f32.mrb[0].mxu0
        %v834 = vadd.f32 %v349, %v833
        %v835 = vpop.f32.mrb[0].mxu0
        %836 = vmatprep.mubr.bf16.mxu0 0
        %837 = vmatmul.mubr.bf16.gmra.mrb[0].mxu0 %v594
        %v838 = vpop.f32.mrb[0].mxu0
        %v839 = vadd.f32 %v349, %v838
        %v840 = vpop.f32.mrb[0].mxu0
        %v841 = vpop.f32.mrb[0].mxu0
        %v842 = vadd.f32 %v349, %v841
        %v843 = vpop.f32.mrb[0].mxu0
        %844 = vmatprep.mubr.bf16.mxu0 0
        %845 = vmatmul.mubr.bf16.gmra.mrb[0].mxu0 %v597
        %v846 = vpop.f32.mrb[0].mxu0
        %v847 = vadd.f32 %v349, %v846
        %v848 = vpop.f32.mrb[0].mxu0
        %v849 = vpop.f32.mrb[0].mxu0
        %v850 = vadd.f32 %v349, %v849
        %v851 = vpop.f32.mrb[0].mxu0
        %852 = vmatprep.mubr.bf16.mxu0 0
        %853 = vmatmul.mubr.bf16.gmra.mrb[0].mxu0 %v600
        %v854 = vpop.f32.mrb[0].mxu0
        %v855 = vadd.f32 %v349, %v854
        %v856 = vpop.f32.mrb[0].mxu0
        %v857 = vpop.f32.mrb[0].mxu0
        %v858 = vadd.f32 %v349, %v857
        %v859 = vpop.f32.mrb[0].mxu0
        %860 = vmatprep.mubr.bf16.mxu0 0
        %861 = vmatmul.mubr.bf16.gmra.mrb[0].mxu0 %v603
        %v862 = vpop.f32.mrb[0].mxu0
        %v863 = vadd.f32 %v349, %v862
        %v864 = vpop.f32.mrb[0].mxu0
        %v865 = vpop.f32.mrb[0].mxu0
        %v866 = vadd.f32 %v349, %v865
        %v867 = vpop.f32.mrb[0].mxu0
        %868 = vmatprep.mubr.bf16.mxu0 0
        %869 = vmatmul.mubr.bf16.gmra.mrb[0].mxu0 %v606
        %v870 = vpop.f32.mrb[0].mxu0
        %v871 = vadd.f32 %v349, %v870
        %v872 = vpop.f32.mrb[0].mxu0
        %v873 = vpop.f32.mrb[0].mxu0
        %v874 = vadd.f32 %v349, %v873
        %v875 = vpop.f32.mrb[0].mxu0
        %876 = vmatprep.mubr.bf16.mxu0 0
        %877 = vmatmul.mubr.bf16.gmra.mrb[0].mxu0 %v609
        %v878 = vpop.f32.mrb[0].mxu0
        %v879 = vadd.f32 %v349, %v878
        %v880 = vpop.f32.mrb[0].mxu0
        %v881 = vpop.f32.mrb[0].mxu0
        %v882 = vadd.f32 %v349, %v881
        %v883 = vpop.f32.mrb[0].mxu0
        %884 = vmatprep.mubr.bf16.mxu0 0
        %885 = vmatmul.mubr.bf16.gmra.mrb[0].mxu0 %v612
        %v886 = vpop.f32.mrb[0].mxu0
        %v887 = vadd.f32 %v349, %v886
        %v888 = vpop.f32.mrb[0].mxu0
        %v889 = vpop.f32.mrb[0].mxu0
        %v890 = vadd.f32 %v349, %v889
        %v891 = vpop.f32.mrb[0].mxu0
        %892 = vmatprep.mubr.bf16.mxu0 0
        %893 = vmatmul.mubr.bf16.gmra.mrb[0].mxu0 %v615
        %v894 = vpop.f32.mrb[0].mxu0
        %v895 = vadd.f32 %v349, %v894
        %v896 = vpop.f32.mrb[0].mxu0
        %v897 = vpop.f32.mrb[0].mxu0
        %v898 = vadd.f32 %v349, %v897
        %v899 = vpop.f32.mrb[0].mxu0
        %900 = vmatprep.mubr.bf16.mxu0 0
        %901 = vmatmul.mubr.bf16.gmra.mrb[0].mxu0 %v618
        %v902 = vpop.f32.mrb[0].mxu0
        %v903 = vadd.f32 %v349, %v902
        %v904 = vpop.f32.mrb[0].mxu0
        %v905 = vpop.f32.mrb[0].mxu0
        %v906 = vadd.f32 %v349, %v905
        %v907 = vpop.f32.mrb[0].mxu0
        %908 = vdwg.mxu0
        %v909 = vmax.f32 %v655, 0.0
        %v910 = vmax.f32 %v658, 0.0
        %v911 = vmax.f32 %v663, 0.0
        %v912 = vmax.f32 %v666, 0.0
        %v913 = vmax.f32 %v671, 0.0
        %v914 = vmax.f32 %v674, 0.0
        %v915 = vmax.f32 %v679, 0.0
        %v916 = vmax.f32 %v682, 0.0
        %v917 = vmax.f32 %v687, 0.0
        %v918 = vmax.f32 %v690, 0.0
        %v919 = vmax.f32 %v695, 0.0
        %v920 = vmax.f32 %v698, 0.0
        %v921 = vmax.f32 %v703, 0.0
        %v922 = vmax.f32 %v706, 0.0
        %v923 = vmax.f32 %v711, 0.0
        %v924 = vmax.f32 %v714, 0.0
        %v925 = vmax.f32 %v719, 0.0
        %v926 = vmax.f32 %v722, 0.0
        %v927 = vmax.f32 %v727, 0.0
        %v928 = vmax.f32 %v730, 0.0
        %v929 = vmax.f32 %v735, 0.0
        %v930 = vmax.f32 %v738, 0.0
        %v931 = vmax.f32 %v743, 0.0
        %v932 = vmax.f32 %v746, 0.0
        %v933 = vmax.f32 %v751, 0.0
        %v934 = vmax.f32 %v754, 0.0
        %v935 = vmax.f32 %v759, 0.0
        %v936 = vmax.f32 %v762, 0.0
        %v937 = vmax.f32 %v767, 0.0
        %v938 = vmax.f32 %v770, 0.0
        %v939 = vmax.f32 %v775, 0.0
        %v940 = vmax.f32 %v778, 0.0
        %v941 = vmax.f32 %v783, 0.0
        %v942 = vmax.f32 %v786, 0.0
        %v943 = vmax.f32 %v791, 0.0
        %v944 = vmax.f32 %v794, 0.0
        %v945 = vmax.f32 %v799, 0.0
        %v946 = vmax.f32 %v802, 0.0
        %v947 = vmax.f32 %v807, 0.0
        %v948 = vmax.f32 %v810, 0.0
        %v949 = vmax.f32 %v815, 0.0
        %v950 = vmax.f32 %v818, 0.0
        %v951 = vmax.f32 %v823, 0.0
        %v952 = vmax.f32 %v826, 0.0
        %v953 = vmax.f32 %v831, 0.0
        %v954 = vmax.f32 %v834, 0.0
        %v955 = vmax.f32 %v839, 0.0
        %v956 = vmax.f32 %v842, 0.0
        %v957 = vmax.f32 %v847, 0.0
        %v958 = vmax.f32 %v850, 0.0
        %v959 = vmax.f32 %v855, 0.0
        %v960 = vmax.f32 %v858, 0.0
        %v961 = vmax.f32 %v863, 0.0
        %v962 = vmax.f32 %v866, 0.0
        %v963 = vmax.f32 %v871, 0.0
        %v964 = vmax.f32 %v874, 0.0
        %v965 = vmax.f32 %v879, 0.0
        %v966 = vmax.f32 %v882, 0.0
        %v967 = vmax.f32 %v887, 0.0
        %v968 = vmax.f32 %v890, 0.0
        %v969 = vmax.f32 %v895, 0.0
        %v970 = vmax.f32 %v898, 0.0
        %v971 = vmax.f32 %v903, 0.0
        %v972 = vmax.f32 %v906, 0.0
        %v973 = vpack.c.bf16 %v910, %v909
        %v974 = vpack.c.bf16 %v912, %v911
        %v975 = vpack.c.bf16 %v914, %v913
        %v976 = vpack.c.bf16 %v916, %v915
        %v977 = vpack.c.bf16 %v918, %v917
        %v978 = vpack.c.bf16 %v920, %v919
        %v979 = vpack.c.bf16 %v922, %v921
        %v980 = vpack.c.bf16 %v924, %v923
        %v981 = vpack.c.bf16 %v926, %v925
        %v982 = vpack.c.bf16 %v928, %v927
        %v983 = vpack.c.bf16 %v930, %v929
        %v984 = vpack.c.bf16 %v932, %v931
        %v985 = vpack.c.bf16 %v934, %v933
        %v986 = vpack.c.bf16 %v936, %v935
        %v987 = vpack.c.bf16 %v938, %v937
        %v988 = vpack.c.bf16 %v940, %v939
        %v989 = vpack.c.bf16 %v942, %v941
        %v990 = vpack.c.bf16 %v944, %v943
        %v991 = vpack.c.bf16 %v946, %v945
        %v992 = vpack.c.bf16 %v948, %v947
        %v993 = vpack.c.bf16 %v950, %v949
        %v994 = vpack.c.bf16 %v952, %v951
        %v995 = vpack.c.bf16 %v954, %v953
        %v996 = vpack.c.bf16 %v956, %v955
        %v997 = vpack.c.bf16 %v958, %v957
        %v998 = vpack.c.bf16 %v960, %v959
        %v999 = vpack.c.bf16 %v962, %v961
        %v1000 = vpack.c.bf16 %v964, %v963
        %v1001 = vpack.c.bf16 %v966, %v965
        %v1002 = vpack.c.bf16 %v968, %v967
        %v1003 = vpack.c.bf16 %v970, %v969
        %v1004 = vpack.c.bf16 %v972, %v971
        %v1037 = vunpack.c.l.b16 %v973
        %v1038 = vunpack.c.h.b16 %v973
        %v1039 = vunpack.c.l.b16 %v974
        %v1040 = vunpack.c.h.b16 %v974
        %v1041 = vunpack.c.l.b16 %v975
        %v1042 = vunpack.c.h.b16 %v975
        %v1043 = vunpack.c.l.b16 %v976
        %v1044 = vunpack.c.h.b16 %v976
        %v1045 = vunpack.c.l.b16 %v977
        %v1046 = vunpack.c.h.b16 %v977
        %v1047 = vunpack.c.l.b16 %v978
        %v1048 = vunpack.c.h.b16 %v978
        %v1049 = vunpack.c.l.b16 %v979
        %v1050 = vunpack.c.h.b16 %v979
        %v1051 = vunpack.c.l.b16 %v980
        %v1052 = vunpack.c.h.b16 %v980
        %v1053 = vunpack.c.l.b16 %v981
        %v1054 = vunpack.c.h.b16 %v981
        %v1055 = vunpack.c.l.b16 %v982
        %v1056 = vunpack.c.h.b16 %v982
        %v1057 = vunpack.c.l.b16 %v983
        %v1058 = vunpack.c.h.b16 %v983
        %v1059 = vunpack.c.l.b16 %v984
        %v1060 = vunpack.c.h.b16 %v984
        %v1061 = vunpack.c.l.b16 %v985
        %v1062 = vunpack.c.h.b16 %v985
        %v1063 = vunpack.c.l.b16 %v986
        %v1064 = vunpack.c.h.b16 %v986
        %v1065 = vunpack.c.l.b16 %v987
        %v1066 = vunpack.c.h.b16 %v987
        %v1067 = vunpack.c.l.b16 %v988
        %v1068 = vunpack.c.h.b16 %v988
        %v1069 = vunpack.c.l.b16 %v989
        %v1070 = vunpack.c.h.b16 %v989
        %v1071 = vunpack.c.l.b16 %v990
        %v1072 = vunpack.c.h.b16 %v990
        %v1073 = vunpack.c.l.b16 %v991
        %v1074 = vunpack.c.h.b16 %v991
        %v1075 = vunpack.c.l.b16 %v992
        %v1076 = vunpack.c.h.b16 %v992
        %v1077 = vunpack.c.l.b16 %v993
        %v1078 = vunpack.c.h.b16 %v993
        %v1079 = vunpack.c.l.b16 %v994
        %v1080 = vunpack.c.h.b16 %v994
        %v1081 = vunpack.c.l.b16 %v995
        %v1082 = vunpack.c.h.b16 %v995
        %v1083 = vunpack.c.l.b16 %v996
        %v1084 = vunpack.c.h.b16 %v996
        %v1085 = vunpack.c.l.b16 %v997
        %v1086 = vunpack.c.h.b16 %v997
        %v1087 = vunpack.c.l.b16 %v998
        %v1088 = vunpack.c.h.b16 %v998
        %v1089 = vunpack.c.l.b16 %v999
        %v1090 = vunpack.c.h.b16 %v999
        %v1091 = vunpack.c.l.b16 %v1000
        %v1092 = vunpack.c.h.b16 %v1000
        %v1093 = vunpack.c.l.b16 %v1001
        %v1094 = vunpack.c.h.b16 %v1001
        %v1095 = vunpack.c.l.b16 %v1002
        %v1096 = vunpack.c.h.b16 %v1002
        %v1097 = vunpack.c.l.b16 %v1003
        %v1098 = vunpack.c.h.b16 %v1003
        %v1099 = vunpack.c.l.b16 %v1004
        %v1100 = vunpack.c.h.b16 %v1004
        %v1101 = vpack.c.b16 %v1037, %v1037
        %v1102 = vpack.c.b16 %v1038, %v1038
        %v1103 = vpack.c.b16 %v1039, %v1039
        %v1104 = vpack.c.b16 %v1040, %v1040
        %v1105 = vpack.c.b16 %v1041, %v1041
        %v1106 = vpack.c.b16 %v1042, %v1042
        %v1107 = vpack.c.b16 %v1043, %v1043
        %v1108 = vpack.c.b16 %v1044, %v1044
        %v1109 = vpack.c.b16 %v1045, %v1045
        %v1110 = vpack.c.b16 %v1046, %v1046
        %v1111 = vpack.c.b16 %v1047, %v1047
        %v1112 = vpack.c.b16 %v1048, %v1048
        %v1113 = vpack.c.b16 %v1049, %v1049
        %v1114 = vpack.c.b16 %v1050, %v1050
        %v1115 = vpack.c.b16 %v1051, %v1051
        %v1116 = vpack.c.b16 %v1052, %v1052
        %v1117 = vpack.c.b16 %v1053, %v1053
        %v1118 = vpack.c.b16 %v1054, %v1054
        %v1119 = vpack.c.b16 %v1055, %v1055
        %v1120 = vpack.c.b16 %v1056, %v1056
        %v1121 = vpack.c.b16 %v1057, %v1057
        %v1122 = vpack.c.b16 %v1058, %v1058
        %v1123 = vpack.c.b16 %v1059, %v1059
        %v1124 = vpack.c.b16 %v1060, %v1060
        %v1125 = vpack.c.b16 %v1061, %v1061
        %v1126 = vpack.c.b16 %v1062, %v1062
        %v1127 = vpack.c.b16 %v1063, %v1063
        %v1128 = vpack.c.b16 %v1064, %v1064
        %v1129 = vpack.c.b16 %v1065, %v1065
        %v1130 = vpack.c.b16 %v1066, %v1066
        %v1131 = vpack.c.b16 %v1067, %v1067
        %v1132 = vpack.c.b16 %v1068, %v1068
        %v1133 = vpack.c.b16 %v1069, %v1069
        %v1134 = vpack.c.b16 %v1070, %v1070
        %v1135 = vpack.c.b16 %v1071, %v1071
        %v1136 = vpack.c.b16 %v1072, %v1072
        %v1137 = vpack.c.b16 %v1073, %v1073
        %v1138 = vpack.c.b16 %v1074, %v1074
        %v1139 = vpack.c.b16 %v1075, %v1075
        %v1140 = vpack.c.b16 %v1076, %v1076
        %v1141 = vpack.c.b16 %v1077, %v1077
        %v1142 = vpack.c.b16 %v1078, %v1078
        %v1143 = vpack.c.b16 %v1079, %v1079
        %v1144 = vpack.c.b16 %v1080, %v1080
        %v1145 = vpack.c.b16 %v1081, %v1081
        %v1146 = vpack.c.b16 %v1082, %v1082
        %v1147 = vpack.c.b16 %v1083, %v1083
        %v1148 = vpack.c.b16 %v1084, %v1084
        %v1149 = vpack.c.b16 %v1085, %v1085
        %v1150 = vpack.c.b16 %v1086, %v1086
        %v1151 = vpack.c.b16 %v1087, %v1087
        %v1152 = vpack.c.b16 %v1088, %v1088
        %v1153 = vpack.c.b16 %v1089, %v1089
        %v1154 = vpack.c.b16 %v1090, %v1090
        %v1155 = vpack.c.b16 %v1091, %v1091
        %v1156 = vpack.c.b16 %v1092, %v1092
        %v1157 = vpack.c.b16 %v1093, %v1093
        %v1158 = vpack.c.b16 %v1094, %v1094
        %v1159 = vpack.c.b16 %v1095, %v1095
        %v1160 = vpack.c.b16 %v1096, %v1096
        %v1161 = vpack.c.b16 %v1097, %v1097
        %v1162 = vpack.c.b16 %v1098, %v1098
        %v1163 = vpack.c.b16 %v1099, %v1099
        %v1164 = vpack.c.b16 %v1100, %v1100
        %1229 = vst [vmem:[%s240] sm:$0xf] %v1101
        %1230 = vst [vmem:[%s240 + $0x4] sm:$0xf] %v1102
        %1231 = vst [vmem:[%s240 + $0x8] sm:$0xf] %v1103
        %1232 = vst [vmem:[%s240 + $0xc] sm:$0xf] %v1104
        %1233 = vst [vmem:[%s240 + $0x10] sm:$0xf] %v1105
        %1234 = vst [vmem:[%s240 + $0x14] sm:$0xf] %v1106
        %1235 = vst [vmem:[%s240 + $0x18] sm:$0xf] %v1107
        %1236 = vst [vmem:[%s240 + $0x1c] sm:$0xf] %v1108
        %1237 = vst [vmem:[%s240 + $0x20] sm:$0xf] %v1109
        %1238 = vst [vmem:[%s240 + $0x24] sm:$0xf] %v1110
        %1239 = vst [vmem:[%s240 + $0x28] sm:$0xf] %v1111
        %1240 = vst [vmem:[%s240 + $0x2c] sm:$0xf] %v1112
        %1241 = vst [vmem:[%s240 + $0x30] sm:$0xf] %v1113
        %1242 = vst [vmem:[%s240 + $0x34] sm:$0xf] %v1114
        %1243 = vst [vmem:[%s240 + $0x38] sm:$0xf] %v1115
        %1244 = vst [vmem:[%s240 + $0x3c] sm:$0xf] %v1116
        %1245 = vst [vmem:[%s240 + $0x40] sm:$0xf] %v1117
        %1246 = vst [vmem:[%s240 + $0x44] sm:$0xf] %v1118
        %1247 = vst [vmem:[%s240 + $0x48] sm:$0xf] %v1119
        %1248 = vst [vmem:[%s240 + $0x4c] sm:$0xf] %v1120
        %1249 = vst [vmem:[%s240 + $0x50] sm:$0xf] %v1121
        %1250 = vst [vmem:[%s240 + $0x54] sm:$0xf] %v1122
        %1251 = vst [vmem:[%s240 + $0x58] sm:$0xf] %v1123
        %1252 = vst [vmem:[%s240 + $0x5c] sm:$0xf] %v1124
        %1253 = vst [vmem:[%s240 + $0x60] sm:$0xf] %v1125
        %1254 = vst [vmem:[%s240 + $0x64] sm:$0xf] %v1126
        %1255 = vst [vmem:[%s240 + $0x68] sm:$0xf] %v1127
        %1256 = vst [vmem:[%s240 + $0x6c] sm:$0xf] %v1128
        %1257 = vst [vmem:[%s240 + $0x70] sm:$0xf] %v1129
        %1258 = vst [vmem:[%s240 + $0x74] sm:$0xf] %v1130
        %1259 = vst [vmem:[%s240 + $0x78] sm:$0xf] %v1131
        %1260 = vst [vmem:[%s240 + $0x7c] sm:$0xf] %v1132
        %1261 = vst [vmem:[%s240 + $0x80] sm:$0xf] %v1133
        %1262 = vst [vmem:[%s240 + $0x84] sm:$0xf] %v1134
        %1263 = vst [vmem:[%s240 + $0x88] sm:$0xf] %v1135
        %1264 = vst [vmem:[%s240 + $0x8c] sm:$0xf] %v1136
        %1265 = vst [vmem:[%s240 + $0x90] sm:$0xf] %v1137
        %1266 = vst [vmem:[%s240 + $0x94] sm:$0xf] %v1138
        %1267 = vst [vmem:[%s240 + $0x98] sm:$0xf] %v1139
        %1268 = vst [vmem:[%s240 + $0x9c] sm:$0xf] %v1140
        %1269 = vst [vmem:[%s240 + $0xa0] sm:$0xf] %v1141
        %1270 = vst [vmem:[%s240 + $0xa4] sm:$0xf] %v1142
        %1271 = vst [vmem:[%s240 + $0xa8] sm:$0xf] %v1143
        %1272 = vst [vmem:[%s240 + $0xac] sm:$0xf] %v1144
        %1273 = vst [vmem:[%s240 + $0xb0] sm:$0xf] %v1145
        %1274 = vst [vmem:[%s240 + $0xb4] sm:$0xf] %v1146
        %1275 = vst [vmem:[%s240 + $0xb8] sm:$0xf] %v1147
        %1276 = vst [vmem:[%s240 + $0xbc] sm:$0xf] %v1148
        %1277 = vst [vmem:[%s240 + $0xc0] sm:$0xf] %v1149
        %1278 = vst [vmem:[%s240 + $0xc4] sm:$0xf] %v1150
        %1279 = vst [vmem:[%s240 + $0xc8] sm:$0xf] %v1151
        %1280 = vst [vmem:[%s240 + $0xcc] sm:$0xf] %v1152
        %1281 = vst [vmem:[%s240 + $0xd0] sm:$0xf] %v1153
        %1282 = vst [vmem:[%s240 + $0xd4] sm:$0xf] %v1154
        %1283 = vst [vmem:[%s240 + $0xd8] sm:$0xf] %v1155
        %1284 = vst [vmem:[%s240 + $0xdc] sm:$0xf] %v1156
        %1285 = vst [vmem:[%s240 + $0xe0] sm:$0xf] %v1157
        %1286 = vst [vmem:[%s240 + $0xe4] sm:$0xf] %v1158
        %1287 = vst [vmem:[%s240 + $0xe8] sm:$0xf] %v1159
        %1288 = vst [vmem:[%s240 + $0xec] sm:$0xf] %v1160
        %1289 = vst [vmem:[%s240 + $0xf0] sm:$0xf] %v1161
        %1290 = vst [vmem:[%s240 + $0xf4] sm:$0xf] %v1162
        %1291 = vst [vmem:[%s240 + $0xf8] sm:$0xf] %v1163
        %1292 = vst [vmem:[%s240 + $0xfc] sm:$0xf] %v1164
        %s1293 = sand.u32 %s128, 1
        %s1294 = scalar_lea.sflag [#allocation3], %s1293
        %s1295 = sand.u32 %s128, 1
        %s1296 = smul.addr %s1295, 256
        %s1297 = scalar_lea.vmem [#allocation2], %s1296
        // Predicated region
        $region33: #{tpu_custom_call.1} parent=31 // pred_check
          %p1298 = pneg %p138
        $region34: #{tpu_custom_call.1} parent=31 // pred_check_branch
          %1300 = sbr.rel (%p1298) target = $region36
        $region35: #{tpu_custom_call.1} parent=31 // pred_region
          %s1301 = smul.u32 64, %s22
          %s1302 = ssub.s32 381, %s1301
          %p1303 = scmp.lt.s32.totalorder %s1302, 64
          %s1304 = scalar_select %p1303, %s1302, 64
          %s1305 = smul.u32 64, %s1304
          %s1307 = ssub.s32 4096, %s1305
          %1308 = vsyncadd %s1294, %s1307
          %p1309 = scmp.ne.s32.totalorder 0, %s1305
          %s1310 = sadd.s32 %s23, %s1301
          %s1311 = smul.addr %s1310, 64
          %s1312 = scalar_lea.hbm %s3, %s1311
          %s1313 = smul.u32 4, %s1304
          %s1314 = sshll.u32 %s1297, 4
          %s1315 = int_to_ptr.vmem [resolvable:$true] %s1314
          %s1316 = sshll.u32 %s1313, 4
          %1320 = dma.vmem_to_hbm [thread:$0]  (%p1309), %s1315, %s1316, %s1312, %s1294, 64, 64, 4
        $region36: #{tpu_custom_call.1} parent=31 // pred_fallthru
          _
      $region32: #{tpu_custom_call.1} parent=5 // pred_fallthru
        _
      %p1321 = scmp.le.s32.totalorder 2, %s12
      // Predicated region
      $region37: #{tpu_custom_call.1} parent=5 // pred_check
        %p1322 = pneg %p1321
      $region38: #{tpu_custom_call.1} parent=5 // pred_check_branch
        %1324 = sbr.rel (%p1322) target = $region40
      $region39: #{tpu_custom_call.1} parent=5 // pred_region
        %s1325 = ssub.s32 %s12, 2
        // Predicated region
        $region41: #{tpu_custom_call.1} parent=39 // pred_check
          %p1326 = pneg %p144
        $region42: #{tpu_custom_call.1} parent=39 // pred_check_branch
          %1328 = sbr.rel (%p1326) target = $region44
        $region43: #{tpu_custom_call.1} parent=39 // pred_region
          %s1329 = sand.u32 %s129, 1
          %s1330 = scalar_lea.sflag [#allocation3], %s1329
          %s1331 = sand.u32 %s129, 1
          %s1332 = smul.addr %s1331, 256
          %s1333 = scalar_lea.vmem [#allocation2], %s1332
          %1334 = dma.done %s1330, 4096
        $region44: #{tpu_custom_call.1} parent=39 // pred_fallthru
          _
      $region40: #{tpu_custom_call.1} parent=5 // pred_fallthru
        _
    $region6: #{tpu_custom_call.1} parent=1 // loop_footer
      %s16 = sadd.s32 1, %s12
    $region7: #{tpu_custom_call.1} parent=1 // loop_footer_branch
      %11 = sbr.rel target = $region3
    $region8: #{tpu_custom_call.1} parent=1 // loop_exit
      _
    %1335 = vsyncpa [#allocation3], 1
    %s1336 = scalar_lea.sflag [#allocation3], 1
    %1337 = vsyncpa %s1336, 1

</llo_original>
